<compile_context>
chip_gen: v5e
topology: v5e:2x2
jax: 0.10.0
libtpu: 0.0.40
codegen_flags: <defaults>
</compile_context>

<pallas_src>
import math

import numpy as np
import jax
import jax.numpy as jnp
from jax import lax
from jax.experimental import pallas as pl
from jax.experimental.pallas import tpu as pltpu


# ---------------------------------------------------------------------------
# Trace-time construction of the banded 1-D upfirdn matrices.
# ---------------------------------------------------------------------------
def _upfirdn1d_matrix(length, taps, up, down, pad0, pad1):
    """Banded matrix A (Lout, L) with A @ x == 1D upfirdn(x, taps, up, down, pad).

    Zero-insertion upsampling, zero padding, the FIR taps and decimation are all
    folded into the matrix, so the kernel never materializes the upsampled or
    padded signal in HBM or VMEM.
    """
    ft = np.asarray(taps, dtype=np.float64)
    k = ft.shape[0]
    lout = (up * length + pad0 + pad1 - k) // down + 1
    a = np.zeros((lout, length), dtype=np.float64)
    for o in range(lout):
        base = down * o - pad0
        for t in range(k):
            j = base + t                      # index into the upsampled signal
            if j < 0 or (j % up) != 0:
                continue                      # padding zero or inserted zero
            i = j // up
            if 0 <= i < length:
                a[o, i] += ft[t]
    return a


# ---------------------------------------------------------------------------
# VMEM accounting / tile selection (generation-aware, padded shapes).
# ---------------------------------------------------------------------------
def _rup(x, m):
    return (x + m - 1) // m * m


def _vmem_capacity_bytes():
    try:
        cap = int(pltpu.get_tpu_info().vmem_capacity_bytes)
        if cap > 0:
            return cap
    except Exception:
        pass
    return 64 * 2 ** 20            # conservative: smallest per-TensorCore VMEM (v7x)


def _tile_bytes(t, h, w, hout, wout, itemsize):
    """Padded-VMEM footprint of one grid step: lane/sublane padded input & output
    blocks (double-buffered) plus the f32 intermediate of the horizontal pass."""
    sub = max(8, 32 // itemsize)                       # f32 -> 8, bf16 -> 16 sublanes
    in_blk = t * _rup(h, sub) * _rup(w, 128) * itemsize * 2
    out_blk = t * _rup(hout, sub) * _rup(wout, 128) * itemsize * 2
    v_scr = t * _rup(h, 8) * _rup(wout, 128) * 4
    return in_blk + out_blk + v_scr


def _pick_tile(nc, h, w, hout, wout, itemsize, a_bytes, budget):
    """Planes per grid step: largest count whose padded blocks fit the VMEM budget,
    aligned so the plane-flattened fallback keeps 8-divisible sublane extents, and
    capped so there are >= 2 grid steps whenever nc > 1."""
    per_plane = _tile_bytes(1, h, w, hout, wout, itemsize)
    avail = max(budget - a_bytes, per_plane)
    t_budget = max(1, avail // per_plane)
    align = math.lcm(8 // math.gcd(h, 8), 8 // math.gcd(hout, 8))
    cap = nc if nc <= 1 else -(-nc // 2)               # ceil(nc / 2): >= 2 steps
    tile = (min(t_budget, cap) // align) * align
    if tile >= align:
        return int(tile)
    # Cannot keep both alignment and >= 2 steps: a single full-extent block is always
    # layout-legal; otherwise use one aligned group.
    return int(min(max(align, 1), nc))


# ---------------------------------------------------------------------------
# Kernels.
# ---------------------------------------------------------------------------
def _make_batched_kernel():
    """Fully batched variant: two big MXU matmuls per grid step, no per-plane loop."""
    def kernel(ah_ref, awt_ref, x_ref, o_ref):
        x3 = x_ref[...]                                            # (T, H, W)
        # Horizontal pass: one matmul with M = T*H rows.
        v = lax.dot_general(x3, awt_ref[...], (((2,), (0,)), ((), ())),
                            preferred_element_type=jnp.float32)    # (T, H, Wout) f32
        # Vertical pass: single contraction of H over the whole stack,
        # i.e. (Hout, H) @ (H, T*Wout) with a lane-dense N dimension.
        y = lax.dot_general(ah_ref[...], v, (((1,), (1,)), ((), ())),
                            preferred_element_type=jnp.float32)    # (Hout, T, Wout)
        o_ref[...] = jnp.transpose(y, (1, 0, 2)).astype(o_ref.dtype)
    return kernel


def _make_looped_kernel(tile, h, hout):
    """Fallback variant on plane-flattened 2-D blocks: batched horizontal matmul plus a
    fori_loop of small vertical matmuls (only ops guaranteed to lower on Mosaic)."""
    def kernel(ah_ref, awt_ref, x_ref, o_ref, v_ref):
        # Horizontal pass: one (T*H, W) @ (W, Wout) matmul for all planes.
        v_ref[...] = jnp.dot(x_ref[...], awt_ref[...],
                             preferred_element_type=jnp.float32)
        ah = ah_ref[...]                                           # (Hout, H) f32

        def body(t, carry):
            r_in = t * h
            r_out = t * hout
            if h % 8 == 0:
                r_in = pl.multiple_of(r_in, 8)
            if hout % 8 == 0:
                r_out = pl.multiple_of(r_out, 8)
            blk = v_ref[pl.ds(r_in, h), :]                         # (H, Wout) f32
            y = jnp.dot(ah, blk, preferred_element_type=jnp.float32)
            o_ref[pl.ds(r_out, hout), :] = y.astype(o_ref.dtype)
            return carry

        lax.fori_loop(0, tile, body, 0, unroll=True if tile <= 8 else 8)
    return kernel


def _call_batched(ah_arr, awt_arr, x3, nc, h, w, hout, wout, tile, vmem_limit, a_pipe):
    a_kw = {} if a_pipe is None else {"pipeline_mode": a_pipe}
    return pl.pallas_call(
        _make_batched_kernel(),
        out_shape=jax.ShapeDtypeStruct((nc, hout, wout), x3.dtype),
        grid=(pl.cdiv(nc, tile),),
        in_specs=[
            pl.BlockSpec((hout, h), lambda i: (0, 0), **a_kw),     # A_h, VMEM-resident
            pl.BlockSpec((w, wout), lambda i: (0, 0), **a_kw),     # A_w^T, VMEM-resident
            pl.BlockSpec((tile, h, w), lambda i: (i, 0, 0)),
        ],
        out_specs=pl.BlockSpec((tile, hout, wout), lambda i: (i, 0, 0)),
        compiler_params=pltpu.CompilerParams(
            dimension_semantics=("parallel",),
            vmem_limit_bytes=vmem_limit,
        ),
    )(ah_arr, awt_arr, x3)


def _call_looped(ah_arr, awt_arr, x2, nc, h, w, hout, wout, tile, vmem_limit, a_pipe):
    a_kw = {} if a_pipe is None else {"pipeline_mode": a_pipe}
    return pl.pallas_call(
        _make_looped_kernel(tile, h, hout),
        out_shape=jax.ShapeDtypeStruct((nc * hout, wout), x2.dtype),
        grid=(pl.cdiv(nc, tile),),
        in_specs=[
            pl.BlockSpec((hout, h), lambda i: (0, 0), **a_kw),
            pl.BlockSpec((w, wout), lambda i: (0, 0), **a_kw),
            pl.BlockSpec((tile * h, w), lambda i: (i, 0)),
        ],
        out_specs=pl.BlockSpec((tile * hout, wout), lambda i: (i, 0)),
        scratch_shapes=[pltpu.VMEM((tile * h, wout), jnp.float32)],
        compiler_params=pltpu.CompilerParams(
            dimension_semantics=("parallel",),
            vmem_limit_bytes=vmem_limit,
        ),
    )(ah_arr, awt_arr, x2)


# ---------------------------------------------------------------------------
# Public wrapper.
# ---------------------------------------------------------------------------
def upfirdn2d_pallas(x, taps1d, *, up, down, padding, gain):
    """upfirdn2d on NCHW input; all resampling math runs inside one Pallas kernel."""
    n, c, h, w = x.shape
    px0, px1, py0, py1 = padding
    f1r = np.asarray(taps1d, dtype=np.float64)[::-1]    # flip => true convolution

    # Banded matrices folding zero-upsample, pad, FIR taps, decimation and gain.
    ah = _upfirdn1d_matrix(h, f1r * float(gain), up, down, py0, py1)
    aw = _upfirdn1d_matrix(w, f1r, up, down, px0, px1)
    hout, wout = ah.shape[0], aw.shape[0]

    # A_h stays f32 (it multiplies the f32 intermediate).  A_w^T is cast to the input
    # dtype so the big input matmul runs at native MXU rate with no VPU upcast of x
    # (the [1,3,3,1]/8 taps, and taps*gain, are exact in bf16).
    ah_arr = jnp.asarray(ah.astype(np.float32))
    awt_np = np.ascontiguousarray(aw.T).astype(np.float32)
    if x.dtype == jnp.bfloat16:
        awt_arr = jnp.asarray(awt_np).astype(jnp.bfloat16)
    else:
        awt_arr = jnp.asarray(awt_np)

    nc = n * c
    itemsize = jnp.dtype(x.dtype).itemsize
    capacity = _vmem_capacity_bytes()
    # Per-generation grid-step budget: ~40 MiB on 128-MiB-VMEM chips (v5e/v6e),
    # ~21 MiB on v7x (64 MiB per TensorCore), leaving headroom for Mosaic internals.
    budget = min(capacity // 3, 40 << 20)
    sub = max(8, 32 // itemsize)
    a_bytes = (_rup(hout, 8) * _rup(h, 128) * 4 +
               _rup(w, sub) * _rup(wout, 128) * itemsize) * 2
    tile = _pick_tile(nc, h, w, hout, wout, itemsize, a_bytes, budget)
    need = _tile_bytes(tile, h, w, hout, wout, itemsize) + a_bytes
    vmem_limit = int(min(capacity * 3 // 4,
                         max(need * 3 // 2 + (2 << 20), 16 << 20)))

    x3 = x.reshape(nc, h, w)          # free (row-major) views, no HBM pass
    x2 = x.reshape(nc * h, w)

    attempts = (
        ("batched", pl.Buffered(1)),  # fully-batched matmuls + single-buffered A
        ("batched", None),            # same kernel, default double buffering for A
        ("looped", None),             # conservative fallback (always lowers)
    )
    last_err = None
    for variant, a_pipe in attempts:
        try:
            if variant == "batched":
                y = _call_batched(ah_arr, awt_arr, x3, nc, h, w, hout, wout,
                                  tile, vmem_limit, a_pipe)
            else:
                y2 = _call_looped(ah_arr, awt_arr, x2, nc, h, w, hout, wout,
                                  tile, vmem_limit, a_pipe)
                y = y2.reshape(nc, hout, wout)
            jax.block_until_ready(y)
            return y.reshape(n, c, hout, wout)
        except Exception as err:      # lowering/compile rejection -> next variant
            last_err = err
    raise last_err


class Upfirdn2dPallas:
    """Mirror of dp2/generator/triagan.py::Upfirdn2d(down, up)."""

    def __init__(self, down=1, up=1):
        assert up <= 2
        taps = np.asarray([1.0, 3.0, 3.0, 1.0], dtype=np.float64)
        taps = taps / taps.sum()                       # normalized 1-D taps
        self.taps1d = taps
        # setup_filter([1,3,3,1]): outer product, sum-normalized == outer(taps, taps)
        self.resample_filter = np.outer(taps, taps)
        fh = fw = taps.shape[0]
        px0 = px1 = py0 = py1 = 0
        if up > 1:
            px0 += (fw + up - 1) // 2
            px1 += (fw - up) // 2
            py0 += (fh + up - 1) // 2
            py1 += (fh - up) // 2
        if down > 1:
            px0 += (fw - down + 1) // 2
            px1 += (fw - down) // 2
            py0 += (fh - down + 1) // 2
            py1 += (fh - down) // 2
        self.down = down
        self.up = up
        self.padding = [px0, px1, py0, py1]
        self.gain = up ** 2

    def __call__(self, x, *args):
        if isinstance(x, dict):
            x = dict(x)
            x['x'] = upfirdn2d_pallas(x['x'], self.taps1d, up=self.up,
                                      down=self.down, padding=self.padding,
                                      gain=self.gain)
            return x
        y = upfirdn2d_pallas(x, self.taps1d, up=self.up, down=self.down,
                             padding=self.padding, gain=self.gain)
        if len(args) == 0:
            return y
        return (y, *args)


# ---------------------------------------------------------------------------
# Independent float64 reference (literal upsample -> pad -> conv -> downsample).
# ---------------------------------------------------------------------------
def _upfirdn2d_ref_np(x, f2d, *, up, down, padding, gain):
    x = np.asarray(x, np.float64)
    f = np.asarray(f2d, np.float64) * float(gain)
    f = f[::-1, ::-1]                                   # conv == correlate with flip
    px0, px1, py0, py1 = padding
    n, c, h, w = x.shape
    xu = np.zeros((n, c, h * up, w * up), np.float64)
    xu[:, :, ::up, ::up] = x
    xp = np.pad(xu, ((0, 0), (0, 0), (py0, py1), (px0, px1)))
    kh, kw = f.shape
    ho = xp.shape[2] - kh + 1
    wo = xp.shape[3] - kw + 1
    out = np.zeros((n, c, ho, wo), np.float64)
    for i in range(kh):
        for j in range(kw):
            out += f[i, j] * xp[:, :, i:i + ho, j:j + wo]
    return out[:, :, ::down, ::down]


if __name__ == "__main__":
    key = jax.random.PRNGKey(0)
    x = jax.random.normal(key, (2, 4, 16, 16), dtype=jnp.float32)
    # Round the test input to bf16-representable values so the comparison is
    # insensitive to MXU input-rounding policy; the reference runs in float64.
    x = x.astype(jnp.bfloat16).astype(jnp.float32)
    x_np = np.asarray(x)

    # Default config (down=1, up=1) plus the resampling variants the module supports.
    for (down, up) in [(1, 1), (1, 2), (2, 1), (2, 2)]:
        mod = Upfirdn2dPallas(down=down, up=up)
        y = jax.block_until_ready(mod(x))
        y_ref = _upfirdn2d_ref_np(x_np, mod.resample_filter, up=up, down=down,
                                  padding=mod.padding, gain=mod.gain)
        assert y.shape == y_ref.shape, (down, up, y.shape, y_ref.shape)
        # Tolerance sized for worst-case MXU pass precision; genuine padding / gain /
        # tap bugs produce O(0.1 .. 1) deviations and are still caught.
        np.testing.assert_allclose(np.asarray(y), y_ref, rtol=5e-3, atol=5e-3)

    # bf16 I/O smoke test (bf16 into the MXU, f32 accumulation inside the kernel).
    mod_bf = Upfirdn2dPallas(down=1, up=2)
    y_bf = jax.block_until_ready(mod_bf(x.astype(jnp.bfloat16)))
    assert y_bf.shape == (2, 4, 32, 32) and y_bf.dtype == jnp.bfloat16

    print("KERNEL_OK")
</pallas_src>

<mosaic_0001>
module attributes {stable_mosaic.version = 11 : i64} {
  func.func @kernel(%arg0: i32, %arg1: memref<13x16xf32, #tpu.memory_space<vmem>>, %arg2: memref<16x13xf32, #tpu.memory_space<vmem>>, %arg3: memref<8x16x16xf32, #tpu.memory_space<vmem>>, %arg4: memref<8x13x13xf32, #tpu.memory_space<vmem>>) attributes {dimension_semantics = [#tpu.dimension_semantics<parallel>], iteration_bounds = array<i64: 1>, scalar_prefetch = 0 : i64, scratch_operands = 0 : i64, tpu.core_type = #tpu.core_type<tc>, window_params = [{pipeline_mode = #tpu.pipeline_mode<synchronous>, transform_indices = @transform_0, window_bounds = array<i64: 13, 16>}, {pipeline_mode = #tpu.pipeline_mode<synchronous>, transform_indices = @transform_1, window_bounds = array<i64: 16, 13>}, {transform_indices = @transform_2, window_bounds = array<i64: 8, 16, 16>}, {transform_indices = @transform_3, window_bounds = array<i64: 8, 13, 13>}]} {
    %c0 = arith.constant 0 : index
    %c0_0 = arith.constant 0 : index
    %c0_1 = arith.constant 0 : index
    %0 = vector.load %arg3[%c0, %c0_0, %c0_1] : memref<8x16x16xf32, #tpu.memory_space<vmem>>, vector<8x16x16xf32>
    %c0_2 = arith.constant 0 : index
    %c0_3 = arith.constant 0 : index
    %1 = vector.load %arg2[%c0_2, %c0_3] : memref<16x13xf32, #tpu.memory_space<vmem>>, vector<16x13xf32>
    %cst = arith.constant dense<0.000000e+00> : vector<8x16x13xf32>
    %2 = tpu.matmul %0, %1, %cst {dimension_numbers = #tpu.dot_dimension_numbers<[2], [0], [0, 1], [1], [0, 0, 0, 1, 1, 1], [], []>} : vector<8x16x16xf32>, vector<16x13xf32>, vector<8x16x13xf32> -> vector<8x16x13xf32>
    %c0_4 = arith.constant 0 : index
    %c0_5 = arith.constant 0 : index
    %3 = vector.load %arg1[%c0_4, %c0_5] : memref<13x16xf32, #tpu.memory_space<vmem>>, vector<13x16xf32>
    %cst_6 = arith.constant dense<0.000000e+00> : vector<13x8x13xf32>
    %4 = tpu.matmul %3, %2, %cst_6 {dimension_numbers = #tpu.dot_dimension_numbers<[1], [1], [0], [0, 2], [0, 0, 1, 0, 1, 2], [], []>} : vector<13x16xf32>, vector<8x16x13xf32>, vector<13x8x13xf32> -> vector<13x8x13xf32>
    %5 = tpu.transpose %4, [1, 0, 2] : vector<13x8x13xf32> -> vector<8x13x13xf32>
    %c0_7 = arith.constant 0 : index
    %c0_8 = arith.constant 0 : index
    %c0_9 = arith.constant 0 : index
    %6 = vector.load %arg4[%c0_7, %c0_8, %c0_9] : memref<8x13x13xf32, #tpu.memory_space<vmem>>, vector<8x13x13xf32>
    tpu.vector_store %arg4[%c0_7, %c0_8, %c0_9], %5 {strides = array<i32>} : memref<8x13x13xf32, #tpu.memory_space<vmem>>, vector<8x13x13xf32>,
    return
  }
  func.func @transform_0(%arg0: i32) -> (i32, i32) {
    %c0_i32 = arith.constant 0 : i32
    %c0_i32_0 = arith.constant 0 : i32
    %c0_i32_1 = arith.constant 0 : i32
    return %c0_i32, %c0_i32_0 : i32, i32
  }
  func.func @transform_1(%arg0: i32) -> (i32, i32) {
    %c0_i32 = arith.constant 0 : i32
    %c0_i32_0 = arith.constant 0 : i32
    %c0_i32_1 = arith.constant 0 : i32
    return %c0_i32, %c0_i32_0 : i32, i32
  }
  func.func @transform_2(%arg0: i32) -> (i32, i32, i32) {
    %c0_i32 = arith.constant 0 : i32
    %c0_i32_0 = arith.constant 0 : i32
    %c0_i32_1 = arith.constant 0 : i32
    return %arg0, %c0_i32, %c0_i32_0 : i32, i32, i32
  }
  func.func @transform_3(%arg0: i32) -> (i32, i32, i32) {
    %c0_i32 = arith.constant 0 : i32
    %c0_i32_0 = arith.constant 0 : i32
    %c0_i32_1 = arith.constant 0 : i32
    return %arg0, %c0_i32, %c0_i32_0 : i32, i32, i32
  }
}

module attributes {stable_mosaic.version = 11 : i64} {
  func.func @kernel(%arg0: i32, %arg1: memref<13x16xf32, #tpu.memory_space<vmem>>, %arg2: memref<16x13xf32, #tpu.memory_space<vmem>>, %arg3: memref<8x16x16xf32, #tpu.memory_space<vmem>>, %arg4: memref<8x13x13xf32, #tpu.memory_space<vmem>>) attributes {dimension_semantics = [#tpu.dimension_semantics<parallel>], iteration_bounds = array<i64: 1>, scalar_prefetch = 0 : i64, scratch_operands = 0 : i64, tpu.core_type = #tpu.core_type<tc>, window_params = [{pipeline_mode = #tpu.pipeline_mode<synchronous>, transform_indices = @transform_0, window_bounds = array<i64: 13, 16>}, {pipeline_mode = #tpu.pipeline_mode<synchronous>, transform_indices = @transform_1, window_bounds = array<i64: 16, 13>}, {transform_indices = @transform_2, window_bounds = array<i64: 8, 16, 16>}, {transform_indices = @transform_3, window_bounds = array<i64: 8, 13, 13>}]} {
    %c0 = arith.constant 0 : index
    %c0_0 = arith.constant 0 : index
    %c0_1 = arith.constant 0 : index
    %0 = vector.load %arg3[%c0, %c0_0, %c0_1] : memref<8x16x16xf32, #tpu.memory_space<vmem>>, vector<8x16x16xf32>
    %c0_2 = arith.constant 0 : index
    %c0_3 = arith.constant 0 : index
    %1 = vector.load %arg2[%c0_2, %c0_3] : memref<16x13xf32, #tpu.memory_space<vmem>>, vector<16x13xf32>
    %cst = arith.constant dense<0.000000e+00> : vector<8x16x13xf32>
    %2 = tpu.matmul %0, %1, %cst {dimension_numbers = #tpu.dot_dimension_numbers<[2], [0], [0, 1], [1], [0, 0, 0, 1, 1, 1], [], []>} : vector<8x16x16xf32>, vector<16x13xf32>, vector<8x16x13xf32> -> vector<8x16x13xf32>
    %c0_4 = arith.constant 0 : index
    %c0_5 = arith.constant 0 : index
    %3 = vector.load %arg1[%c0_4, %c0_5] : memref<13x16xf32, #tpu.memory_space<vmem>>, vector<13x16xf32>
    %cst_6 = arith.constant dense<0.000000e+00> : vector<13x8x13xf32>
    %4 = tpu.matmul %3, %2, %cst_6 {dimension_numbers = #tpu.dot_dimension_numbers<[1], [1], [0], [0, 2], [0, 0, 1, 0, 1, 2], [], []>} : vector<13x16xf32>, vector<8x16x13xf32>, vector<13x8x13xf32> -> vector<13x8x13xf32>
    %5 = tpu.transpose %4, [1, 0, 2] : vector<13x8x13xf32> -> vector<8x13x13xf32>
    %c0_7 = arith.constant 0 : index
    %c0_8 = arith.constant 0 : index
    %c0_9 = arith.constant 0 : index
    %6 = vector.load %arg4[%c0_7, %c0_8, %c0_9] : memref<8x13x13xf32, #tpu.memory_space<vmem>>, vector<8x13x13xf32>
    tpu.vector_store %arg4[%c0_7, %c0_8, %c0_9], %5 {strides = array<i32>} : memref<8x13x13xf32, #tpu.memory_space<vmem>>, vector<8x13x13xf32>,
    return
  }
  func.func @transform_0(%arg0: i32) -> (i32, i32) {
    %c0_i32 = arith.constant 0 : i32
    %c0_i32_0 = arith.constant 0 : i32
    %c0_i32_1 = arith.constant 0 : i32
    return %c0_i32, %c0_i32_0 : i32, i32
  }
  func.func @transform_1(%arg0: i32) -> (i32, i32) {
    %c0_i32 = arith.constant 0 : i32
    %c0_i32_0 = arith.constant 0 : i32
    %c0_i32_1 = arith.constant 0 : i32
    return %c0_i32, %c0_i32_0 : i32, i32
  }
  func.func @transform_2(%arg0: i32) -> (i32, i32, i32) {
    %c0_i32 = arith.constant 0 : i32
    %c0_i32_0 = arith.constant 0 : i32
    %c0_i32_1 = arith.constant 0 : i32
    return %arg0, %c0_i32, %c0_i32_0 : i32, i32, i32
  }
  func.func @transform_3(%arg0: i32) -> (i32, i32, i32) {
    %c0_i32 = arith.constant 0 : i32
    %c0_i32_0 = arith.constant 0 : i32
    %c0_i32_1 = arith.constant 0 : i32
    return %arg0, %c0_i32, %c0_i32_0 : i32, i32, i32
  }
}

module attributes {stable_mosaic.version = 11 : i64} {
  func.func @kernel(%arg0: i32, %arg1: memref<13x16xf32, #tpu.memory_space<vmem>>, %arg2: memref<16x13xf32, #tpu.memory_space<vmem>>, %arg3: memref<128x16xf32, #tpu.memory_space<vmem>>, %arg4: memref<104x13xf32, #tpu.memory_space<vmem>>, %arg5: memref<128x13xf32, #tpu.memory_space<vmem>>) attributes {dimension_semantics = [#tpu.dimension_semantics<parallel>], iteration_bounds = array<i64: 1>, scalar_prefetch = 0 : i64, scratch_operands = 1 : i64, tpu.core_type = #tpu.core_type<tc>, window_params = [{pipeline_mode = #tpu.pipeline_mode<synchronous>, transform_indices = @transform_0, window_bounds = array<i64: 13, 16>}, {pipeline_mode = #tpu.pipeline_mode<synchronous>, transform_indices = @transform_1, window_bounds = array<i64: 16, 13>}, {transform_indices = @transform_2, window_bounds = array<i64: 128, 16>}, {transform_indices = @transform_3, window_bounds = array<i64: 104, 13>}]} {
    %c0 = arith.constant 0 : index
    %c0_0 = arith.constant 0 : index
    %0 = vector.load %arg3[%c0, %c0_0] : memref<128x16xf32, #tpu.memory_space<vmem>>, vector<128x16xf32>
    %c0_1 = arith.constant 0 : index
    %c0_2 = arith.constant 0 : index
    %1 = vector.load %arg2[%c0_1, %c0_2] : memref<16x13xf32, #tpu.memory_space<vmem>>, vector<16x13xf32>
    %cst = arith.constant dense<0.000000e+00> : vector<128x13xf32>
    %2 = tpu.matmul %0, %1, %cst {dimension_numbers = #tpu.dot_dimension_numbers<[1], [0], [0], [1], [0, 0, 1, 1], [], []>} : vector<128x16xf32>, vector<16x13xf32>, vector<128x13xf32> -> vector<128x13xf32>
    %c0_3 = arith.constant 0 : index
    %c0_4 = arith.constant 0 : index
    %3 = vector.load %arg5[%c0_3, %c0_4] : memref<128x13xf32, #tpu.memory_space<vmem>>, vector<128x13xf32>
    tpu.vector_store %arg5[%c0_3, %c0_4], %2 {strides = array<i32>} : memref<128x13xf32, #tpu.memory_space<vmem>>, vector<128x13xf32>,
    %c0_5 = arith.constant 0 : index
    %c0_6 = arith.constant 0 : index
    %4 = vector.load %arg1[%c0_5, %c0_6] : memref<13x16xf32, #tpu.memory_space<vmem>>, vector<13x16xf32>
    %c0_i32 = arith.constant 0 : i32
    %c16_i32 = arith.constant 16 : i32
    %5 = arith.muli %c0_i32, %c16_i32 : i32
    %c13_i32 = arith.constant 13 : i32
    %6 = arith.muli %c0_i32, %c13_i32 : i32
    %7 = tpu.assume_multiple %5, 8 : i32
    %8 = arith.index_cast %7 : i32 to index
    %c0_7 = arith.constant 0 : index
    %9 = vector.load %arg5[%8, %c0_7] : memref<128x13xf32, #tpu.memory_space<vmem>>, vector<16x13xf32>
    %cst_8 = arith.constant dense<0.000000e+00> : vector<13x13xf32>
    %10 = tpu.matmul %4, %9, %cst_8 {dimension_numbers = #tpu.dot_dimension_numbers<[1], [0], [0], [1], [0, 0, 1, 1], [], []>} : vector<13x16xf32>, vector<16x13xf32>, vector<13x13xf32> -> vector<13x13xf32>
    %11 = arith.index_cast %6 : i32 to index
    %c0_9 = arith.constant 0 : index
    %12 = vector.load %arg4[%11, %c0_9] : memref<104x13xf32, #tpu.memory_space<vmem>>, vector<13x13xf32>
    tpu.vector_store %arg4[%11, %c0_9], %10 {strides = array<i32>} : memref<104x13xf32, #tpu.memory_space<vmem>>, vector<13x13xf32>,
    %c1_i32 = arith.constant 1 : i32
    %c16_i32_10 = arith.constant 16 : i32
    %13 = arith.muli %c1_i32, %c16_i32_10 : i32
    %c13_i32_11 = arith.constant 13 : i32
    %14 = arith.muli %c1_i32, %c13_i32_11 : i32
    %15 = tpu.assume_multiple %13, 8 : i32
    %16 = arith.index_cast %15 : i32 to index
    %c0_12 = arith.constant 0 : index
    %17 = vector.load %arg5[%16, %c0_12] : memref<128x13xf32, #tpu.memory_space<vmem>>, vector<16x13xf32>
    %cst_13 = arith.constant dense<0.000000e+00> : vector<13x13xf32>
    %18 = tpu.matmul %4, %17, %cst_13 {dimension_numbers = #tpu.dot_dimension_numbers<[1], [0], [0], [1], [0, 0, 1, 1], [], []>} : vector<13x16xf32>, vector<16x13xf32>, vector<13x13xf32> -> vector<13x13xf32>
    %19 = arith.index_cast %14 : i32 to index
    %c0_14 = arith.constant 0 : index
    %20 = vector.load %arg4[%19, %c0_14] : memref<104x13xf32, #tpu.memory_space<vmem>>, vector<13x13xf32>
    tpu.vector_store %arg4[%19, %c0_14], %18 {strides = array<i32>} : memref<104x13xf32, #tpu.memory_space<vmem>>, vector<13x13xf32>,
    %c2_i32 = arith.constant 2 : i32
    %c16_i32_15 = arith.constant 16 : i32
    %21 = arith.muli %c2_i32, %c16_i32_15 : i32
    %c13_i32_16 = arith.constant 13 : i32
    %22 = arith.muli %c2_i32, %c13_i32_16 : i32
    %23 = tpu.assume_multiple %21, 8 : i32
    %24 = arith.index_cast %23 : i32 to index
    %c0_17 = arith.constant 0 : index
    %25 = vector.load %arg5[%24, %c0_17] : memref<128x13xf32, #tpu.memory_space<vmem>>, vector<16x13xf32>
    %cst_18 = arith.constant dense<0.000000e+00> : vector<13x13xf32>
    %26 = tpu.matmul %4, %25, %cst_18 {dimension_numbers = #tpu.dot_dimension_numbers<[1], [0], [0], [1], [0, 0, 1, 1], [], []>} : vector<13x16xf32>, vector<16x13xf32>, vector<13x13xf32> -> vector<13x13xf32>
    %27 = arith.index_cast %22 : i32 to index
    %c0_19 = arith.constant 0 : index
    %28 = vector.load %arg4[%27, %c0_19] : memref<104x13xf32, #tpu.memory_space<vmem>>, vector<13x13xf32>
    tpu.vector_store %arg4[%27, %c0_19], %26 {strides = array<i32>} : memref<104x13xf32, #tpu.memory_space<vmem>>, vector<13x13xf32>,
    %c3_i32 = arith.constant 3 : i32
    %c16_i32_20 = arith.constant 16 : i32
    %29 = arith.muli %c3_i32, %c16_i32_20 : i32
    %c13_i32_21 = arith.constant 13 : i32
    %30 = arith.muli %c3_i32, %c13_i32_21 : i32
    %31 = tpu.assume_multiple %29, 8 : i32
    %32 = arith.index_cast %31 : i32 to index
    %c0_22 = arith.constant 0 : index
    %33 = vector.load %arg5[%32, %c0_22] : memref<128x13xf32, #tpu.memory_space<vmem>>, vector<16x13xf32>
    %cst_23 = arith.constant dense<0.000000e+00> : vector<13x13xf32>
    %34 = tpu.matmul %4, %33, %cst_23 {dimension_numbers = #tpu.dot_dimension_numbers<[1], [0], [0], [1], [0, 0, 1, 1], [], []>} : vector<13x16xf32>, vector<16x13xf32>, vector<13x13xf32> -> vector<13x13xf32>
    %35 = arith.index_cast %30 : i32 to index
    %c0_24 = arith.constant 0 : index
    %36 = vector.load %arg4[%35, %c0_24] : memref<104x13xf32, #tpu.memory_space<vmem>>, vector<13x13xf32>
    tpu.vector_store %arg4[%35, %c0_24], %34 {strides = array<i32>} : memref<104x13xf32, #tpu.memory_space<vmem>>, vector<13x13xf32>,
    %c4_i32 = arith.constant 4 : i32
    %c16_i32_25 = arith.constant 16 : i32
    %37 = arith.muli %c4_i32, %c16_i32_25 : i32
    %c13_i32_26 = arith.constant 13 : i32
    %38 = arith.muli %c4_i32, %c13_i32_26 : i32
    %39 = tpu.assume_multiple %37, 8 : i32
    %40 = arith.index_cast %39 : i32 to index
    %c0_27 = arith.constant 0 : index
    %41 = vector.load %arg5[%40, %c0_27] : memref<128x13xf32, #tpu.memory_space<vmem>>, vector<16x13xf32>
    %cst_28 = arith.constant dense<0.000000e+00> : vector<13x13xf32>
    %42 = tpu.matmul %4, %41, %cst_28 {dimension_numbers = #tpu.dot_dimension_numbers<[1], [0], [0], [1], [0, 0, 1, 1], [], []>} : vector<13x16xf32>, vector<16x13xf32>, vector<13x13xf32> -> vector<13x13xf32>
    %43 = arith.index_cast %38 : i32 to index
    %c0_29 = arith.constant 0 : index
    %44 = vector.load %arg4[%43, %c0_29] : memref<104x13xf32, #tpu.memory_space<vmem>>, vector<13x13xf32>
    tpu.vector_store %arg4[%43, %c0_29], %42 {strides = array<i32>} : memref<104x13xf32, #tpu.memory_space<vmem>>, vector<13x13xf32>,
    %c5_i32 = arith.constant 5 : i32
    %c16_i32_30 = arith.constant 16 : i32
    %45 = arith.muli %c5_i32, %c16_i32_30 : i32
    %c13_i32_31 = arith.constant 13 : i32
    %46 = arith.muli %c5_i32, %c13_i32_31 : i32
    %47 = tpu.assume_multiple %45, 8 : i32
    %48 = arith.index_cast %47 : i32 to index
    %c0_32 = arith.constant 0 : index
    %49 = vector.load %arg5[%48, %c0_32] : memref<128x13xf32, #tpu.memory_space<vmem>>, vector<16x13xf32>
    %cst_33 = arith.constant dense<0.000000e+00> : vector<13x13xf32>
    %50 = tpu.matmul %4, %49, %cst_33 {dimension_numbers = #tpu.dot_dimension_numbers<[1], [0], [0], [1], [0, 0, 1, 1], [], []>} : vector<13x16xf32>, vector<16x13xf32>, vector<13x13xf32> -> vector<13x13xf32>
    %51 = arith.index_cast %46 : i32 to index
    %c0_34 = arith.constant 0 : index
    %52 = vector.load %arg4[%51, %c0_34] : memref<104x13xf32, #tpu.memory_space<vmem>>, vector<13x13xf32>
    tpu.vector_store %arg4[%51, %c0_34], %50 {strides = array<i32>} : memref<104x13xf32, #tpu.memory_space<vmem>>, vector<13x13xf32>,
    %c6_i32 = arith.constant 6 : i32
    %c16_i32_35 = arith.constant 16 : i32
    %53 = arith.muli %c6_i32, %c16_i32_35 : i32
    %c13_i32_36 = arith.constant 13 : i32
    %54 = arith.muli %c6_i32, %c13_i32_36 : i32
    %55 = tpu.assume_multiple %53, 8 : i32
    %56 = arith.index_cast %55 : i32 to index
    %c0_37 = arith.constant 0 : index
    %57 = vector.load %arg5[%56, %c0_37] : memref<128x13xf32, #tpu.memory_space<vmem>>, vector<16x13xf32>
    %cst_38 = arith.constant dense<0.000000e+00> : vector<13x13xf32>
    %58 = tpu.matmul %4, %57, %cst_38 {dimension_numbers = #tpu.dot_dimension_numbers<[1], [0], [0], [1], [0, 0, 1, 1], [], []>} : vector<13x16xf32>, vector<16x13xf32>, vector<13x13xf32> -> vector<13x13xf32>
    %59 = arith.index_cast %54 : i32 to index
    %c0_39 = arith.constant 0 : index
    %60 = vector.load %arg4[%59, %c0_39] : memref<104x13xf32, #tpu.memory_space<vmem>>, vector<13x13xf32>
    tpu.vector_store %arg4[%59, %c0_39], %58 {strides = array<i32>} : memref<104x13xf32, #tpu.memory_space<vmem>>, vector<13x13xf32>,
    %c7_i32 = arith.constant 7 : i32
    %c16_i32_40 = arith.constant 16 : i32
    %61 = arith.muli %c7_i32, %c16_i32_40 : i32
    %c13_i32_41 = arith.constant 13 : i32
    %62 = arith.muli %c7_i32, %c13_i32_41 : i32
    %63 = tpu.assume_multiple %61, 8 : i32
    %64 = arith.index_cast %63 : i32 to index
    %c0_42 = arith.constant 0 : index
    %65 = vector.load %arg5[%64, %c0_42] : memref<128x13xf32, #tpu.memory_space<vmem>>, vector<16x13xf32>
    %cst_43 = arith.constant dense<0.000000e+00> : vector<13x13xf32>
    %66 = tpu.matmul %4, %65, %cst_43 {dimension_numbers = #tpu.dot_dimension_numbers<[1], [0], [0], [1], [0, 0, 1, 1], [], []>} : vector<13x16xf32>, vector<16x13xf32>, vector<13x13xf32> -> vector<13x13xf32>
    %67 = arith.index_cast %62 : i32 to index
    %c0_44 = arith.constant 0 : index
    %68 = vector.load %arg4[%67, %c0_44] : memref<104x13xf32, #tpu.memory_space<vmem>>, vector<13x13xf32>
    tpu.vector_store %arg4[%67, %c0_44], %66 {strides = array<i32>} : memref<104x13xf32, #tpu.memory_space<vmem>>, vector<13x13xf32>,
    %c8_i32 = arith.constant 8 : i32
    return
  }
  func.func @transform_0(%arg0: i32) -> (i32, i32) {
    %c0_i32 = arith.constant 0 : i32
    %c0_i32_0 = arith.constant 0 : i32
    %c0_i32_1 = arith.constant 0 : i32
    return %c0_i32, %c0_i32_0 : i32, i32
  }
  func.func @transform_1(%arg0: i32) -> (i32, i32) {
    %c0_i32 = arith.constant 0 : i32
    %c0_i32_0 = arith.constant 0 : i32
    %c0_i32_1 = arith.constant 0 : i32
    return %c0_i32, %c0_i32_0 : i32, i32
  }
  func.func @transform_2(%arg0: i32) -> (i32, i32) {
    %c0_i32 = arith.constant 0 : i32
    %c0_i32_0 = arith.constant 0 : i32
    return %arg0, %c0_i32 : i32, i32
  }
  func.func @transform_3(%arg0: i32) -> (i32, i32) {
    %c0_i32 = arith.constant 0 : i32
    %c0_i32_0 = arith.constant 0 : i32
    return %arg0, %c0_i32 : i32, i32
  }
}

</mosaic_0001>

<llo_original>
// kernel: tpu_custom_call.1
$region0: #{tpu_custom_call.1}
  #allocation0 [shape = 'u32[]', space=smem, size = 0x4, offset = 0x4, fixed_abs, tag = 'smem constant byte address 0x4 - core index']
  #allocation1 [shape = 'u32[72,128]{1,0:T(1,128)}', space=vmem, size = 0x9000, scoped, tag = 'internal scratch']
  %s0 = inlined_call_operand.hbm [shape: f32[13,16], index: 0, kind: input, shape index: {}]
  %s1 = inlined_call_operand.hbm [shape: f32[16,13], index: 1, kind: input, shape index: {}]
  %s2 = inlined_call_operand.hbm [shape: f32[8,16,16], index: 2, kind: input, shape index: {}]
  %s3 = inlined_call_operand.vmem [shape: f32[8,13,13], index: 3, kind: output, shape index: {}]
  %s4 = sld [smem:[#allocation0]]
  $region34: #{tpu_custom_call.1} parent=0
    _
  %s6 = ssub.s32 1, %s4
  %s7 = scalar_select 0, %s6, %s4
  $region1: #{tpu_custom_call.1} parent=0
    #allocation2 [shape = 'u8[8192]{0}', space=vmem, size = 0x2000, scoped, tag = 'input window, operand 0, single buffered']
    #allocation3 [shape = 's32[1]{0}', space=sflag, size = 0x4, scoped, tag = 'scoped memory for tpu_custom_call.1']
    #allocation4 [shape = 'u8[8192]{0}', space=vmem, size = 0x2000, scoped, tag = 'input window, operand 1, single buffered']
    #allocation5 [shape = 's32[1]{0}', space=sflag, size = 0x4, scoped, tag = 'scoped memory for tpu_custom_call.1']
    #allocation6 [shape = 'u8[65536]{0}', space=vmem, size = 0x10000, scoped, tag = 'input window, operand 2, single buffered']
    %8 = vsyncpa [#allocation3], 0
    %9 = vsyncpa [#allocation5], 0
    // Predicated region
    $region2: #{tpu_custom_call.1} parent=1 // pred_check
      _
    $region3: #{tpu_custom_call.1} parent=1 // pred_check_branch
      %11 = sbr.rel (0) target = $region5
    $region4: #{tpu_custom_call.1} parent=1 // pred_region
      %13 = vsyncadd [#allocation3], 0
      %s14 = sshll.u32 %s0, 4
      %s15 = int_to_ptr.hbm [resolvable:$true] %s14
      %s16 = sshll.u32 [#allocation2], 4
      %s17 = int_to_ptr.vmem [resolvable:$true] %s16
      %22 = dma.hbm_to_vmem [thread:$0]  %s15, 256, %s17, [#allocation3], 128, 128, 8
    $region5: #{tpu_custom_call.1} parent=1 // pred_fallthru
      _
    // Predicated region
    $region6: #{tpu_custom_call.1} parent=1 // pred_check
      _
    $region7: #{tpu_custom_call.1} parent=1 // pred_check_branch
      %24 = sbr.rel (0) target = $region9
    $region8: #{tpu_custom_call.1} parent=1 // pred_region
      %26 = vsyncadd [#allocation5], 0
      %s27 = sshll.u32 %s1, 4
      %s28 = int_to_ptr.hbm [resolvable:$true] %s27
      %s29 = sshll.u32 [#allocation4], 4
      %s30 = int_to_ptr.vmem [resolvable:$true] %s29
      %35 = dma.hbm_to_vmem [thread:$0]  %s28, 256, %s30, [#allocation5], 128, 128, 8
    $region9: #{tpu_custom_call.1} parent=1 // pred_fallthru
      _
    // Predicated region
    $region10: #{tpu_custom_call.1} parent=1 // pred_check
      _
    $region11: #{tpu_custom_call.1} parent=1 // pred_check_branch
      %37 = sbr.rel (0) target = $region13
    $region12: #{tpu_custom_call.1} parent=1 // pred_region
      %39 = vsyncadd [#allocation5], 0
      %s40 = sshll.u32 %s2, 4
      %s41 = int_to_ptr.hbm [resolvable:$true] %s40
      %s42 = sshll.u32 [#allocation6], 4
      %s43 = int_to_ptr.vmem [resolvable:$true] %s42
      %48 = dma.hbm_to_vmem [thread:$0]  %s41, 2048, %s43, [#allocation5], 128, 128, 8
    $region13: #{tpu_custom_call.1} parent=1 // pred_fallthru
      _
    // Predicated region
    $region14: #{tpu_custom_call.1} parent=1 // pred_check
      _
    $region15: #{tpu_custom_call.1} parent=1 // pred_check_branch
      %50 = sbr.rel (0) target = $region17
    $region16: #{tpu_custom_call.1} parent=1 // pred_region
      %52 = dma.done [#allocation3], 256
    $region17: #{tpu_custom_call.1} parent=1 // pred_fallthru
      _
    // Predicated region
    $region18: #{tpu_custom_call.1} parent=1 // pred_check
      _
    $region19: #{tpu_custom_call.1} parent=1 // pred_check_branch
      %54 = sbr.rel (0) target = $region21
    $region20: #{tpu_custom_call.1} parent=1 // pred_region
      %56 = dma.done [#allocation5], 256
    $region21: #{tpu_custom_call.1} parent=1 // pred_fallthru
      _
    // Predicated region
    $region22: #{tpu_custom_call.1} parent=1 // pred_check
      _
    $region23: #{tpu_custom_call.1} parent=1 // pred_check_branch
      %58 = sbr.rel (0) target = $region25
    $region24: #{tpu_custom_call.1} parent=1 // pred_region
      %60 = dma.done [#allocation5], 2048
    $region25: #{tpu_custom_call.1} parent=1 // pred_fallthru
      _
    %v61 = vld [vmem:[#allocation6] sm:$0xff]
    %v62 = vld [vmem:[#allocation6 + $0x8] sm:$0xff]
    %v63 = vld [vmem:[#allocation6 + $0x10] sm:$0xff]
    %v64 = vld [vmem:[#allocation6 + $0x18] sm:$0xff]
    %v65 = vld [vmem:[#allocation6 + $0x20] sm:$0xff]
    %v66 = vld [vmem:[#allocation6 + $0x28] sm:$0xff]
    %v67 = vld [vmem:[#allocation6 + $0x30] sm:$0xff]
    %v68 = vld [vmem:[#allocation6 + $0x38] sm:$0xff]
    %v69 = vld [vmem:[#allocation6 + $0x40] sm:$0xff]
    %v70 = vld [vmem:[#allocation6 + $0x48] sm:$0xff]
    %v71 = vld [vmem:[#allocation6 + $0x50] sm:$0xff]
    %v72 = vld [vmem:[#allocation6 + $0x58] sm:$0xff]
    %v73 = vld [vmem:[#allocation6 + $0x60] sm:$0xff]
    %v74 = vld [vmem:[#allocation6 + $0x68] sm:$0xff]
    %v75 = vld [vmem:[#allocation6 + $0x70] sm:$0xff]
    %v76 = vld [vmem:[#allocation6 + $0x78] sm:$0xff]
    %v77 = vld [vmem:[#allocation4] sm:$0xff]
    %v78 = vld [vmem:[#allocation4 + $0x8] sm:$0xff]
    %vm79 = vcmask 130048
    %v81 = vsel %vm79, %v61, 0
    %v84 = vsel %vm79, %v62, 0
    %v87 = vsel %vm79, %v63, 0
    %v90 = vsel %vm79, %v64, 0
    %v93 = vsel %vm79, %v65, 0
    %v96 = vsel %vm79, %v66, 0
    %v99 = vsel %vm79, %v67, 0
    %v102 = vsel %vm79, %v68, 0
    %v105 = vsel %vm79, %v69, 0
    %v108 = vsel %vm79, %v70, 0
    %v111 = vsel %vm79, %v71, 0
    %v114 = vsel %vm79, %v72, 0
    %v117 = vsel %vm79, %v73, 0
    %v120 = vsel %vm79, %v74, 0
    %v123 = vsel %vm79, %v75, 0
    %v126 = vsel %vm79, %v76, 0
    %128 = vmatpush.msra.mxu0 0.0
    %129 = vmatpush.msra.mxu0 0.0
    %130 = vmatpush.msra.mxu0 0.0
    %131 = vmatpush.msra.mxu0 0.0
    %132 = vmatpush.msra.mxu0 0.0
    %133 = vmatpush.msra.mxu0 0.0
    %134 = vmatpush.msra.mxu0 0.0
    %135 = vmatpush.msra.mxu0 0.0
    %136 = vmatpush.msra.mxu0 0.0
    %137 = vmatpush.msra.mxu0 0.0
    %138 = vmatpush.msra.mxu0 0.0
    %139 = vmatpush.msra.mxu0 0.0
    %140 = vmatpush.msra.mxu0 0.0
    %141 = vmatpush.msra.mxu0 0.0
    %142 = vmatpush.msra.mxu0 %v78
    %143 = vmatpush.msra.mxu0 %v77
    %144 = vmatmul.f32.gmra.mxu0 %v81
    %v145 = vpop.f32.mrf.mxu0
    %v146 = vadd.f32 0.0, %v145
    %147 = vmatmul.f32.gmra.mxu0 %v84
    %v148 = vpop.f32.mrf.mxu0
    %v149 = vadd.f32 0.0, %v148
    %150 = vmatmul.f32.gmra.mxu0 %v87
    %v151 = vpop.f32.mrf.mxu0
    %v152 = vadd.f32 0.0, %v151
    %153 = vmatmul.f32.gmra.mxu0 %v90
    %v154 = vpop.f32.mrf.mxu0
    %v155 = vadd.f32 0.0, %v154
    %156 = vmatmul.f32.gmra.mxu0 %v93
    %v157 = vpop.f32.mrf.mxu0
    %v158 = vadd.f32 0.0, %v157
    %159 = vmatmul.f32.gmra.mxu0 %v96
    %v160 = vpop.f32.mrf.mxu0
    %v161 = vadd.f32 0.0, %v160
    %162 = vmatmul.f32.gmra.mxu0 %v99
    %v163 = vpop.f32.mrf.mxu0
    %v164 = vadd.f32 0.0, %v163
    %165 = vmatmul.f32.gmra.mxu0 %v102
    %v166 = vpop.f32.mrf.mxu0
    %v167 = vadd.f32 0.0, %v166
    %168 = vmatmul.f32.gmra.mxu0 %v105
    %v169 = vpop.f32.mrf.mxu0
    %v170 = vadd.f32 0.0, %v169
    %171 = vmatmul.f32.gmra.mxu0 %v108
    %v172 = vpop.f32.mrf.mxu0
    %v173 = vadd.f32 0.0, %v172
    %174 = vmatmul.f32.gmra.mxu0 %v111
    %v175 = vpop.f32.mrf.mxu0
    %v176 = vadd.f32 0.0, %v175
    %177 = vmatmul.f32.gmra.mxu0 %v114
    %v178 = vpop.f32.mrf.mxu0
    %v179 = vadd.f32 0.0, %v178
    %180 = vmatmul.f32.gmra.mxu0 %v117
    %v181 = vpop.f32.mrf.mxu0
    %v182 = vadd.f32 0.0, %v181
    %183 = vmatmul.f32.gmra.mxu0 %v120
    %v184 = vpop.f32.mrf.mxu0
    %v185 = vadd.f32 0.0, %v184
    %186 = vmatmul.f32.gmra.mxu0 %v123
    %v187 = vpop.f32.mrf.mxu0
    %v188 = vadd.f32 0.0, %v187
    %189 = vmatmul.f32.gmra.mxu0 %v126
    %v190 = vpop.f32.mrf.mxu0
    %v191 = vadd.f32 0.0, %v190
    %192 = vdwg.mxu0
    %v193 = vld [vmem:[#allocation2] sm:$0xff]
    %v194 = vld [vmem:[#allocation2 + $0x8] sm:$0x1f]
    %v195 = vrot.slane %v158, 4
    %vm196 = vcmask 1047556
    %v197 = vsel %vm196, %v195, %v146
    %v198 = vrot.slane %v146, 4
    %v199 = vsel %vm196, %v158, %v198
    %v201 = vunpack.c.l.s4 1983009808
    %v202 = vunpack.c.0.s8 %v201
    %v203 = vperm.slane %v197, %v202
    %v205 = vunpack.c.l.s4 1983009808
    %v206 = vunpack.c.0.s8 %v205
    %v207 = vperm.slane %v199, %v206
    %v208 = vrot.slane %v164, 4
    %v209 = vsel %vm196, %v208, %v152
    %v210 = vrot.slane %v152, 4
    %v211 = vsel %vm196, %v164, %v210
    %v213 = vunpack.c.l.s4 1983009808
    %v214 = vunpack.c.0.s8 %v213
    %v215 = vperm.slane %v209, %v214
    %v217 = vunpack.c.l.s4 1983009808
    %v218 = vunpack.c.0.s8 %v217
    %v219 = vperm.slane %v211, %v218
    %v220 = vrot.slane %v182, 4
    %v221 = vsel %vm196, %v220, %v170
    %v222 = vrot.slane %v170, 4
    %v223 = vsel %vm196, %v182, %v222
    %v225 = vunpack.c.l.s4 1983009808
    %v226 = vunpack.c.0.s8 %v225
    %v227 = vperm.slane %v221, %v226
    %v229 = vunpack.c.l.s4 1983009808
    %v230 = vunpack.c.0.s8 %v229
    %v231 = vperm.slane %v223, %v230
    %v232 = vrot.slane %v188, 4
    %v233 = vsel %vm196, %v232, %v176
    %v234 = vrot.slane %v176, 4
    %v235 = vsel %vm196, %v188, %v234
    %v237 = vunpack.c.l.s4 1983009808
    %v238 = vunpack.c.0.s8 %v237
    %v239 = vperm.slane %v233, %v238
    %v241 = vunpack.c.l.s4 1983009808
    %v242 = vunpack.c.0.s8 %v241
    %v243 = vperm.slane %v235, %v242
    %v244 = vrot.slane %v215, 4
    %v245 = vsel %vm196, %v244, %v203
    %v246 = vrot.slane %v203, 4
    %v247 = vsel %vm196, %v215, %v246
    %v249 = vunpack.c.l.s4 1934713408
    %v250 = vunpack.c.0.s8 %v249
    %v251 = vperm.slane %v245, %v250
    %v253 = vunpack.c.l.s4 1934713408
    %v254 = vunpack.c.0.s8 %v253
    %v255 = vperm.slane %v247, %v254
    %v256 = vrot.slane %v219, 4
    %v257 = vsel %vm196, %v256, %v207
    %v258 = vrot.slane %v207, 4
    %v259 = vsel %vm196, %v219, %v258
    %v261 = vunpack.c.l.s4 1934713408
    %v262 = vunpack.c.0.s8 %v261
    %v263 = vperm.slane %v257, %v262
    %v265 = vunpack.c.l.s4 1934713408
    %v266 = vunpack.c.0.s8 %v265
    %v267 = vperm.slane %v259, %v266
    %v268 = vrot.slane %v239, 4
    %v269 = vsel %vm196, %v268, %v227
    %v270 = vrot.slane %v227, 4
    %v271 = vsel %vm196, %v239, %v270
    %v273 = vunpack.c.l.s4 1934713408
    %v274 = vunpack.c.0.s8 %v273
    %v275 = vperm.slane %v269, %v274
    %v277 = vunpack.c.l.s4 1934713408
    %v278 = vunpack.c.0.s8 %v277
    %v279 = vperm.slane %v271, %v278
    %v280 = vrot.slane %v243, 4
    %v281 = vsel %vm196, %v280, %v231
    %v282 = vrot.slane %v231, 4
    %v283 = vsel %vm196, %v243, %v282
    %v285 = vunpack.c.l.s4 1934713408
    %v286 = vunpack.c.0.s8 %v285
    %v287 = vperm.slane %v281, %v286
    %v289 = vunpack.c.l.s4 1934713408
    %v290 = vunpack.c.0.s8 %v289
    %v291 = vperm.slane %v283, %v290
    %v292 = vrot.slane %v275, 4
    %v293 = vsel %vm196, %v292, %v251
    %v294 = vrot.slane %v251, 4
    %v295 = vsel %vm196, %v275, %v294
    %v296 = vrot.slane %v279, 4
    %v297 = vsel %vm196, %v296, %v255
    %v298 = vrot.slane %v255, 4
    %v299 = vsel %vm196, %v279, %v298
    %v300 = vrot.slane %v287, 4
    %v301 = vsel %vm196, %v300, %v263
    %v302 = vrot.slane %v263, 4
    %v303 = vsel %vm196, %v287, %v302
    %v304 = vrot.slane %v291, 4
    %v305 = vsel %vm196, %v304, %v267
    %v306 = vrot.slane %v267, 4
    %v307 = vsel %vm196, %v291, %v306
    %v308 = vrot.slane %v161, 4
    %v309 = vsel %vm196, %v308, %v149
    %v310 = vrot.slane %v149, 4
    %v311 = vsel %vm196, %v161, %v310
    %v313 = vunpack.c.l.s4 1983009808
    %v314 = vunpack.c.0.s8 %v313
    %v315 = vperm.slane %v309, %v314
    %v317 = vunpack.c.l.s4 1983009808
    %v318 = vunpack.c.0.s8 %v317
    %v319 = vperm.slane %v311, %v318
    %v320 = vrot.slane %v167, 4
    %v321 = vsel %vm196, %v320, %v155
    %v322 = vrot.slane %v155, 4
    %v323 = vsel %vm196, %v167, %v322
    %v325 = vunpack.c.l.s4 1983009808
    %v326 = vunpack.c.0.s8 %v325
    %v327 = vperm.slane %v321, %v326
    %v329 = vunpack.c.l.s4 1983009808
    %v330 = vunpack.c.0.s8 %v329
    %v331 = vperm.slane %v323, %v330
    %v332 = vrot.slane %v185, 4
    %v333 = vsel %vm196, %v332, %v173
    %v334 = vrot.slane %v173, 4
    %v335 = vsel %vm196, %v185, %v334
    %v337 = vunpack.c.l.s4 1983009808
    %v338 = vunpack.c.0.s8 %v337
    %v339 = vperm.slane %v333, %v338
    %v341 = vunpack.c.l.s4 1983009808
    %v342 = vunpack.c.0.s8 %v341
    %v343 = vperm.slane %v335, %v342
    %v344 = vrot.slane %v191, 4
    %v345 = vsel %vm196, %v344, %v179
    %v346 = vrot.slane %v179, 4
    %v347 = vsel %vm196, %v191, %v346
    %v349 = vunpack.c.l.s4 1983009808
    %v350 = vunpack.c.0.s8 %v349
    %v351 = vperm.slane %v345, %v350
    %v353 = vunpack.c.l.s4 1983009808
    %v354 = vunpack.c.0.s8 %v353
    %v355 = vperm.slane %v347, %v354
    %v356 = vrot.slane %v327, 4
    %v357 = vsel %vm196, %v356, %v315
    %v358 = vrot.slane %v315, 4
    %v359 = vsel %vm196, %v327, %v358
    %v361 = vunpack.c.l.s4 1934713408
    %v362 = vunpack.c.0.s8 %v361
    %v363 = vperm.slane %v357, %v362
    %v365 = vunpack.c.l.s4 1934713408
    %v366 = vunpack.c.0.s8 %v365
    %v367 = vperm.slane %v359, %v366
    %v368 = vrot.slane %v331, 4
    %v369 = vsel %vm196, %v368, %v319
    %v370 = vrot.slane %v319, 4
    %v371 = vsel %vm196, %v331, %v370
    %v373 = vunpack.c.l.s4 1934713408
    %v374 = vunpack.c.0.s8 %v373
    %v375 = vperm.slane %v369, %v374
    %v377 = vunpack.c.l.s4 1934713408
    %v378 = vunpack.c.0.s8 %v377
    %v379 = vperm.slane %v371, %v378
    %v380 = vrot.slane %v351, 4
    %v381 = vsel %vm196, %v380, %v339
    %v382 = vrot.slane %v339, 4
    %v383 = vsel %vm196, %v351, %v382
    %v385 = vunpack.c.l.s4 1934713408
    %v386 = vunpack.c.0.s8 %v385
    %v387 = vperm.slane %v381, %v386
    %v389 = vunpack.c.l.s4 1934713408
    %v390 = vunpack.c.0.s8 %v389
    %v391 = vperm.slane %v383, %v390
    %v392 = vrot.slane %v355, 4
    %v393 = vsel %vm196, %v392, %v343
    %v394 = vrot.slane %v343, 4
    %v395 = vsel %vm196, %v355, %v394
    %v397 = vunpack.c.l.s4 1934713408
    %v398 = vunpack.c.0.s8 %v397
    %v399 = vperm.slane %v393, %v398
    %v401 = vunpack.c.l.s4 1934713408
    %v402 = vunpack.c.0.s8 %v401
    %v403 = vperm.slane %v395, %v402
    %v404 = vrot.slane %v387, 4
    %v405 = vsel %vm196, %v404, %v363
    %v406 = vrot.slane %v363, 4
    %v407 = vsel %vm196, %v387, %v406
    %v408 = vrot.slane %v391, 4
    %v409 = vsel %vm196, %v408, %v367
    %v410 = vrot.slane %v367, 4
    %v411 = vsel %vm196, %v391, %v410
    %v412 = vrot.slane %v399, 4
    %v413 = vsel %vm196, %v412, %v375
    %v414 = vrot.slane %v375, 4
    %v415 = vsel %vm196, %v399, %v414
    %v416 = vrot.slane %v403, 4
    %v417 = vsel %vm196, %v416, %v379
    %v418 = vrot.slane %v379, 4
    %v419 = vsel %vm196, %v403, %v418
    %v420 = vrot.slane %v297, 4
    %v421 = vsel %vm196, %v420, %v293
    %v422 = vrot.slane %v293, 4
    %v423 = vsel %vm196, %v297, %v422
    %v425 = vunpack.c.l.s4 1983009808
    %v426 = vunpack.c.0.s8 %v425
    %v427 = vperm.slane %v421, %v426
    %v429 = vunpack.c.l.s4 1983009808
    %v430 = vunpack.c.0.s8 %v429
    %v431 = vperm.slane %v423, %v430
    %v432 = vrot.slane %v299, 4
    %v433 = vsel %vm196, %v432, %v295
    %v434 = vrot.slane %v295, 4
    %v435 = vsel %vm196, %v299, %v434
    %v437 = vunpack.c.l.s4 1983009808
    %v438 = vunpack.c.0.s8 %v437
    %v439 = vperm.slane %v433, %v438
    %v441 = vunpack.c.l.s4 1983009808
    %v442 = vunpack.c.0.s8 %v441
    %v443 = vperm.slane %v435, %v442
    %v444 = vrot.slane %v305, 4
    %v445 = vsel %vm196, %v444, %v301
    %v446 = vrot.slane %v301, 4
    %v447 = vsel %vm196, %v305, %v446
    %v449 = vunpack.c.l.s4 1983009808
    %v450 = vunpack.c.0.s8 %v449
    %v451 = vperm.slane %v445, %v450
    %v453 = vunpack.c.l.s4 1983009808
    %v454 = vunpack.c.0.s8 %v453
    %v455 = vperm.slane %v447, %v454
    %v456 = vrot.slane %v307, 4
    %v457 = vsel %vm196, %v456, %v303
    %v458 = vrot.slane %v303, 4
    %v459 = vsel %vm196, %v307, %v458
    %v461 = vunpack.c.l.s4 1983009808
    %v462 = vunpack.c.0.s8 %v461
    %v463 = vperm.slane %v457, %v462
    %v465 = vunpack.c.l.s4 1983009808
    %v466 = vunpack.c.0.s8 %v465
    %v467 = vperm.slane %v459, %v466
    %v468 = vrot.slane %v439, 4
    %v469 = vsel %vm196, %v468, %v427
    %v470 = vrot.slane %v427, 4
    %v471 = vsel %vm196, %v439, %v470
    %v473 = vunpack.c.l.s4 1934713408
    %v474 = vunpack.c.0.s8 %v473
    %v475 = vperm.slane %v469, %v474
    %v477 = vunpack.c.l.s4 1934713408
    %v478 = vunpack.c.0.s8 %v477
    %v479 = vperm.slane %v471, %v478
    %v480 = vrot.slane %v443, 4
    %v481 = vsel %vm196, %v480, %v431
    %v482 = vrot.slane %v431, 4
    %v483 = vsel %vm196, %v443, %v482
    %v485 = vunpack.c.l.s4 1934713408
    %v486 = vunpack.c.0.s8 %v485
    %v487 = vperm.slane %v481, %v486
    %v489 = vunpack.c.l.s4 1934713408
    %v490 = vunpack.c.0.s8 %v489
    %v491 = vperm.slane %v483, %v490
    %v492 = vrot.slane %v463, 4
    %v493 = vsel %vm196, %v492, %v451
    %v494 = vrot.slane %v451, 4
    %v495 = vsel %vm196, %v463, %v494
    %v497 = vunpack.c.l.s4 1934713408
    %v498 = vunpack.c.0.s8 %v497
    %v499 = vperm.slane %v493, %v498
    %v501 = vunpack.c.l.s4 1934713408
    %v502 = vunpack.c.0.s8 %v501
    %v503 = vperm.slane %v495, %v502
    %v504 = vrot.slane %v467, 4
    %v505 = vsel %vm196, %v504, %v455
    %v506 = vrot.slane %v455, 4
    %v507 = vsel %vm196, %v467, %v506
    %v509 = vunpack.c.l.s4 1934713408
    %v510 = vunpack.c.0.s8 %v509
    %v511 = vperm.slane %v505, %v510
    %v513 = vunpack.c.l.s4 1934713408
    %v514 = vunpack.c.0.s8 %v513
    %v515 = vperm.slane %v507, %v514
    %v516 = vrot.slane %v499, 4
    %v517 = vsel %vm196, %v516, %v475
    %v518 = vrot.slane %v475, 4
    %v519 = vsel %vm196, %v499, %v518
    %v520 = vrot.slane %v503, 4
    %v521 = vsel %vm196, %v520, %v479
    %v522 = vrot.slane %v479, 4
    %v523 = vsel %vm196, %v503, %v522
    %v524 = vrot.slane %v511, 4
    %v525 = vsel %vm196, %v524, %v487
    %v526 = vrot.slane %v487, 4
    %v527 = vsel %vm196, %v511, %v526
    %v528 = vrot.slane %v515, 4
    %v529 = vsel %vm196, %v528, %v491
    %v530 = vrot.slane %v491, 4
    %v531 = vsel %vm196, %v515, %v530
    %v532 = vrot.slane %v409, 4
    %v533 = vsel %vm196, %v532, %v405
    %v534 = vrot.slane %v405, 4
    %v535 = vsel %vm196, %v409, %v534
    %v537 = vunpack.c.l.s4 1983009808
    %v538 = vunpack.c.0.s8 %v537
    %v539 = vperm.slane %v533, %v538
    %v541 = vunpack.c.l.s4 1983009808
    %v542 = vunpack.c.0.s8 %v541
    %v543 = vperm.slane %v535, %v542
    %v544 = vrot.slane %v411, 4
    %v545 = vsel %vm196, %v544, %v407
    %v546 = vrot.slane %v407, 4
    %v547 = vsel %vm196, %v411, %v546
    %v549 = vunpack.c.l.s4 1983009808
    %v550 = vunpack.c.0.s8 %v549
    %v551 = vperm.slane %v545, %v550
    %v553 = vunpack.c.l.s4 1983009808
    %v554 = vunpack.c.0.s8 %v553
    %v555 = vperm.slane %v547, %v554
    %v556 = vrot.slane %v417, 4
    %v557 = vsel %vm196, %v556, %v413
    %v558 = vrot.slane %v413, 4
    %v559 = vsel %vm196, %v417, %v558
    %v561 = vunpack.c.l.s4 1983009808
    %v562 = vunpack.c.0.s8 %v561
    %v563 = vperm.slane %v557, %v562
    %v565 = vunpack.c.l.s4 1983009808
    %v566 = vunpack.c.0.s8 %v565
    %v567 = vperm.slane %v559, %v566
    %v568 = vrot.slane %v419, 4
    %v569 = vsel %vm196, %v568, %v415
    %v570 = vrot.slane %v415, 4
    %v571 = vsel %vm196, %v419, %v570
    %v573 = vunpack.c.l.s4 1983009808
    %v574 = vunpack.c.0.s8 %v573
    %v575 = vperm.slane %v569, %v574
    %v577 = vunpack.c.l.s4 1983009808
    %v578 = vunpack.c.0.s8 %v577
    %v579 = vperm.slane %v571, %v578
    %v580 = vrot.slane %v551, 4
    %v581 = vsel %vm196, %v580, %v539
    %v582 = vrot.slane %v539, 4
    %v583 = vsel %vm196, %v551, %v582
    %v585 = vunpack.c.l.s4 1934713408
    %v586 = vunpack.c.0.s8 %v585
    %v587 = vperm.slane %v581, %v586
    %v589 = vunpack.c.l.s4 1934713408
    %v590 = vunpack.c.0.s8 %v589
    %v591 = vperm.slane %v583, %v590
    %v592 = vrot.slane %v555, 4
    %v593 = vsel %vm196, %v592, %v543
    %v594 = vrot.slane %v543, 4
    %v595 = vsel %vm196, %v555, %v594
    %v597 = vunpack.c.l.s4 1934713408
    %v598 = vunpack.c.0.s8 %v597
    %v599 = vperm.slane %v593, %v598
    %v601 = vunpack.c.l.s4 1934713408
    %v602 = vunpack.c.0.s8 %v601
    %v603 = vperm.slane %v595, %v602
    %v604 = vrot.slane %v575, 4
    %v605 = vsel %vm196, %v604, %v563
    %v606 = vrot.slane %v563, 4
    %v607 = vsel %vm196, %v575, %v606
    %v609 = vunpack.c.l.s4 1934713408
    %v610 = vunpack.c.0.s8 %v609
    %v611 = vperm.slane %v605, %v610
    %v613 = vunpack.c.l.s4 1934713408
    %v614 = vunpack.c.0.s8 %v613
    %v615 = vperm.slane %v607, %v614
    %v616 = vrot.slane %v579, 4
    %v617 = vsel %vm196, %v616, %v567
    %v618 = vrot.slane %v567, 4
    %v619 = vsel %vm196, %v579, %v618
    %v621 = vunpack.c.l.s4 1934713408
    %v622 = vunpack.c.0.s8 %v621
    %v623 = vperm.slane %v617, %v622
    %v625 = vunpack.c.l.s4 1934713408
    %v626 = vunpack.c.0.s8 %v625
    %v627 = vperm.slane %v619, %v626
    %v628 = vrot.slane %v611, 4
    %v629 = vsel %vm196, %v628, %v587
    %v630 = vrot.slane %v587, 4
    %v631 = vsel %vm196, %v611, %v630
    %v632 = vrot.slane %v615, 4
    %v633 = vsel %vm196, %v632, %v591
    %v634 = vrot.slane %v591, 4
    %v635 = vsel %vm196, %v615, %v634
    %v636 = vrot.slane %v623, 4
    %v637 = vsel %vm196, %v636, %v599
    %v638 = vrot.slane %v599, 4
    %v639 = vsel %vm196, %v623, %v638
    %v640 = vrot.slane %v627, 4
    %v641 = vsel %vm196, %v640, %v603
    %v642 = vrot.slane %v603, 4
    %v643 = vsel %vm196, %v627, %v642
    %646 = vrot.lane.b32.xlu0 %v519, 13
    %v647 = vpop.permute.xlu0 %646
    %648 = vrot.lane.b32.xlu0 %v631, 13
    %v649 = vpop.permute.xlu0 %648
    %654 = vrot.lane.b32.xlu0 %v521, 26
    %v655 = vpop.permute.xlu0 %654
    %656 = vrot.lane.b32.xlu0 %v633, 26
    %v657 = vpop.permute.xlu0 %656
    %662 = vrot.lane.b32.xlu0 %v523, 39
    %v663 = vpop.permute.xlu0 %662
    %664 = vrot.lane.b32.xlu0 %v635, 39
    %v665 = vpop.permute.xlu0 %664
    %670 = vrot.lane.b32.xlu0 %v525, 52
    %v671 = vpop.permute.xlu0 %670
    %672 = vrot.lane.b32.xlu0 %v637, 52
    %v673 = vpop.permute.xlu0 %672
    %678 = vrot.lane.b32.xlu0 %v527, 65
    %v679 = vpop.permute.xlu0 %678
    %680 = vrot.lane.b32.xlu0 %v639, 65
    %v681 = vpop.permute.xlu0 %680
    %686 = vrot.lane.b32.xlu0 %v529, 78
    %v687 = vpop.permute.xlu0 %686
    %688 = vrot.lane.b32.xlu0 %v641, 78
    %v689 = vpop.permute.xlu0 %688
    %694 = vrot.lane.b32.xlu0 %v531, 91
    %v695 = vpop.permute.xlu0 %694
    %696 = vrot.lane.b32.xlu0 %v643, 91
    %v697 = vpop.permute.xlu0 %696
    %vm700 = vcmask 105472
    %v701 = vsel %vm700, %v517, %v647
    %v702 = vsel %vm700, %v629, %v649
    %vm703 = vcmask 211968
    %v704 = vsel %vm703, %v701, %v655
    %v705 = vsel %vm703, %v702, %v657
    %vm706 = vcmask 318464
    %v707 = vsel %vm706, %v704, %v663
    %v708 = vsel %vm706, %v705, %v665
    %vm709 = vcmask 424960
    %v710 = vsel %vm709, %v707, %v671
    %v711 = vsel %vm709, %v708, %v673
    %vm712 = vcmask 531456
    %v713 = vsel %vm712, %v710, %v679
    %v714 = vsel %vm712, %v711, %v681
    %vm715 = vcmask 637952
    %v716 = vsel %vm715, %v713, %v687
    %v717 = vsel %vm715, %v714, %v689
    %vm718 = vcmask 744448
    %v719 = vsel %vm718, %v716, %v695
    %v720 = vsel %vm718, %v717, %v697
    %v721 = vsel %vm196, 0.0, 0.0
    %v722 = vsel %vm196, 0.0, 0.0
    %v724 = vunpack.c.l.s4 1983009808
    %v725 = vunpack.c.0.s8 %v724
    %v726 = vperm.slane %v721, %v725
    %v728 = vunpack.c.l.s4 1983009808
    %v729 = vunpack.c.0.s8 %v728
    %v730 = vperm.slane %v722, %v729
    %v731 = vrot.slane %v726, 4
    %v732 = vsel %vm196, %v731, %v726
    %v733 = vsel %vm196, %v726, %v731
    %v735 = vunpack.c.l.s4 1934713408
    %v736 = vunpack.c.0.s8 %v735
    %v737 = vperm.slane %v732, %v736
    %v739 = vunpack.c.l.s4 1934713408
    %v740 = vunpack.c.0.s8 %v739
    %v741 = vperm.slane %v733, %v740
    %v742 = vrot.slane %v730, 4
    %v743 = vsel %vm196, %v742, %v730
    %v744 = vsel %vm196, %v730, %v742
    %v746 = vunpack.c.l.s4 1934713408
    %v747 = vunpack.c.0.s8 %v746
    %v748 = vperm.slane %v743, %v747
    %v750 = vunpack.c.l.s4 1934713408
    %v751 = vunpack.c.0.s8 %v750
    %v752 = vperm.slane %v744, %v751
    %v753 = vrot.slane %v737, 4
    %v754 = vsel %vm196, %v753, %v737
    %v755 = vsel %vm196, %v737, %v753
    %v756 = vrot.slane %v741, 4
    %v757 = vsel %vm196, %v756, %v741
    %v758 = vsel %vm196, %v741, %v756
    %v759 = vrot.slane %v748, 4
    %v760 = vsel %vm196, %v759, %v748
    %v761 = vsel %vm196, %v748, %v759
    %v762 = vrot.slane %v752, 4
    %v763 = vsel %vm196, %v762, %v752
    %v764 = vsel %vm196, %v752, %v762
    %v766 = vunpack.c.l.s4 1983009808
    %v767 = vunpack.c.0.s8 %v766
    %v768 = vperm.slane 0.0, %v767
    %v769 = vrot.slane %v768, 4
    %v770 = vsel %vm196, 0.0, %v769
    %v772 = vunpack.c.l.s4 1934713408
    %v773 = vunpack.c.0.s8 %v772
    %v774 = vperm.slane %v768, %v773
    %v776 = vunpack.c.l.s4 1934713408
    %v777 = vunpack.c.0.s8 %v776
    %v778 = vperm.slane %v770, %v777
    %v779 = vsel %vm196, 0.0, %v742
    %v781 = vunpack.c.l.s4 1934713408
    %v782 = vunpack.c.0.s8 %v781
    %v783 = vperm.slane %v730, %v782
    %v785 = vunpack.c.l.s4 1934713408
    %v786 = vunpack.c.0.s8 %v785
    %v787 = vperm.slane %v779, %v786
    %v788 = vrot.slane %v774, 4
    %v789 = vsel %vm196, %v788, %v737
    %v790 = vsel %vm196, %v774, %v753
    %v791 = vrot.slane %v778, 4
    %v792 = vsel %vm196, %v791, %v741
    %v793 = vsel %vm196, %v778, %v756
    %v794 = vrot.slane %v783, 4
    %v795 = vsel %vm196, %v794, %v748
    %v796 = vsel %vm196, %v783, %v759
    %v797 = vrot.slane %v787, 4
    %v798 = vsel %vm196, %v797, %v752
    %v799 = vsel %vm196, %v787, %v762
    %802 = vrot.lane.b32.xlu0 %v755, 13
    %v803 = vpop.permute.xlu0 %802
    %804 = vrot.lane.b32.xlu0 %v790, 13
    %v805 = vpop.permute.xlu0 %804
    %810 = vrot.lane.b32.xlu0 %v757, 26
    %v811 = vpop.permute.xlu0 %810
    %812 = vrot.lane.b32.xlu0 %v792, 26
    %v813 = vpop.permute.xlu0 %812
    %818 = vrot.lane.b32.xlu0 %v758, 39
    %v819 = vpop.permute.xlu0 %818
    %820 = vrot.lane.b32.xlu0 %v793, 39
    %v821 = vpop.permute.xlu0 %820
    %826 = vrot.lane.b32.xlu0 %v760, 52
    %v827 = vpop.permute.xlu0 %826
    %828 = vrot.lane.b32.xlu0 %v795, 52
    %v829 = vpop.permute.xlu0 %828
    %834 = vrot.lane.b32.xlu0 %v761, 65
    %v835 = vpop.permute.xlu0 %834
    %836 = vrot.lane.b32.xlu0 %v796, 65
    %v837 = vpop.permute.xlu0 %836
    %842 = vrot.lane.b32.xlu0 %v763, 78
    %v843 = vpop.permute.xlu0 %842
    %844 = vrot.lane.b32.xlu0 %v798, 78
    %v845 = vpop.permute.xlu0 %844
    %850 = vrot.lane.b32.xlu0 %v764, 91
    %v851 = vpop.permute.xlu0 %850
    %852 = vrot.lane.b32.xlu0 %v799, 91
    %v853 = vpop.permute.xlu0 %852
    %v856 = vsel %vm700, %v754, %v803
    %v857 = vsel %vm700, %v789, %v805
    %v858 = vsel %vm703, %v856, %v811
    %v859 = vsel %vm703, %v857, %v813
    %v860 = vsel %vm706, %v858, %v819
    %v861 = vsel %vm706, %v859, %v821
    %v862 = vsel %vm709, %v860, %v827
    %v863 = vsel %vm709, %v861, %v829
    %v864 = vsel %vm712, %v862, %v835
    %v865 = vsel %vm712, %v863, %v837
    %v866 = vsel %vm715, %v864, %v843
    %v867 = vsel %vm715, %v865, %v845
    %v868 = vsel %vm718, %v866, %v851
    %v869 = vsel %vm718, %v867, %v853
    %v871 = vsel %vm79, %v193, 0
    %v874 = vsel %vm79, %v194, 0
    %876 = vmatpush.msra.mxu0 0.0
    %877 = vmatpush.msra.mxu0 0.0
    %878 = vmatpush.msra.mxu0 0.0
    %879 = vmatpush.msra.mxu0 0.0
    %880 = vmatpush.msra.mxu0 0.0
    %881 = vmatpush.msra.mxu0 0.0
    %882 = vmatpush.msra.mxu0 0.0
    %883 = vmatpush.msra.mxu0 0.0
    %884 = vmatpush.msra.mxu0 0.0
    %885 = vmatpush.msra.mxu0 0.0
    %886 = vmatpush.msra.mxu0 0.0
    %887 = vmatpush.msra.mxu0 0.0
    %888 = vmatpush.msra.mxu0 0.0
    %889 = vmatpush.msra.mxu0 0.0
    %890 = vmatpush.msra.mxu0 %v720
    %891 = vmatpush.msra.mxu0 %v719
    %892 = vmatmul.f32.gmra.mxu0 %v871
    %v893 = vpop.f32.mrf.mxu0
    %v894 = vadd.f32 %v868, %v893
    %895 = vmatmul.f32.gmra.mxu0 %v874
    %v896 = vpop.f32.mrf.mxu0
    %v897 = vadd.f32 %v869, %v896
    %898 = vdwg.mxu0
    %901 = vrot.lane.b32.xlu0 %v894, 115
    %v902 = vpop.permute.xlu0 %901
    %903 = vrot.lane.b32.xlu0 %v897, 115
    %v904 = vpop.permute.xlu0 %903
    %907 = vrot.lane.b32.xlu0 %v894, 102
    %v908 = vpop.permute.xlu0 %907
    %909 = vrot.lane.b32.xlu0 %v897, 102
    %v910 = vpop.permute.xlu0 %909
    %913 = vrot.lane.b32.xlu0 %v894, 89
    %v914 = vpop.permute.xlu0 %913
    %915 = vrot.lane.b32.xlu0 %v897, 89
    %v916 = vpop.permute.xlu0 %915
    %919 = vrot.lane.b32.xlu0 %v894, 76
    %v920 = vpop.permute.xlu0 %919
    %921 = vrot.lane.b32.xlu0 %v897, 76
    %v922 = vpop.permute.xlu0 %921
    %925 = vrot.lane.b32.xlu0 %v894, 63
    %v926 = vpop.permute.xlu0 %925
    %927 = vrot.lane.b32.xlu0 %v897, 63
    %v928 = vpop.permute.xlu0 %927
    %931 = vrot.lane.b32.xlu0 %v894, 50
    %v932 = vpop.permute.xlu0 %931
    %933 = vrot.lane.b32.xlu0 %v897, 50
    %v934 = vpop.permute.xlu0 %933
    %937 = vrot.lane.b32.xlu0 %v894, 37
    %v938 = vpop.permute.xlu0 %937
    %939 = vrot.lane.b32.xlu0 %v897, 37
    %v940 = vpop.permute.xlu0 %939
    %v943 = vrot.slane %v908, 4
    %v944 = vsel %vm196, %v943, %v894
    %v945 = vrot.slane %v894, 4
    %v946 = vsel %vm196, %v908, %v945
    %v948 = vunpack.c.l.s4 1983009808
    %v949 = vunpack.c.0.s8 %v948
    %v950 = vperm.slane %v944, %v949
    %v952 = vunpack.c.l.s4 1983009808
    %v953 = vunpack.c.0.s8 %v952
    %v954 = vperm.slane %v946, %v953
    %v955 = vrot.slane %v914, 4
    %v956 = vsel %vm196, %v955, %v902
    %v957 = vrot.slane %v902, 4
    %v958 = vsel %vm196, %v914, %v957
    %v960 = vunpack.c.l.s4 1983009808
    %v961 = vunpack.c.0.s8 %v960
    %v962 = vperm.slane %v956, %v961
    %v964 = vunpack.c.l.s4 1983009808
    %v965 = vunpack.c.0.s8 %v964
    %v966 = vperm.slane %v958, %v965
    %v967 = vrot.slane %v932, 4
    %v968 = vsel %vm196, %v967, %v920
    %v969 = vrot.slane %v920, 4
    %v970 = vsel %vm196, %v932, %v969
    %v972 = vunpack.c.l.s4 1983009808
    %v973 = vunpack.c.0.s8 %v972
    %v974 = vperm.slane %v968, %v973
    %v976 = vunpack.c.l.s4 1983009808
    %v977 = vunpack.c.0.s8 %v976
    %v978 = vperm.slane %v970, %v977
    %v979 = vrot.slane %v938, 4
    %v980 = vsel %vm196, %v979, %v926
    %v981 = vrot.slane %v926, 4
    %v982 = vsel %vm196, %v938, %v981
    %v984 = vunpack.c.l.s4 1983009808
    %v985 = vunpack.c.0.s8 %v984
    %v986 = vperm.slane %v980, %v985
    %v988 = vunpack.c.l.s4 1983009808
    %v989 = vunpack.c.0.s8 %v988
    %v990 = vperm.slane %v982, %v989
    %v991 = vrot.slane %v962, 4
    %v992 = vsel %vm196, %v991, %v950
    %v993 = vrot.slane %v950, 4
    %v994 = vsel %vm196, %v962, %v993
    %v996 = vunpack.c.l.s4 1934713408
    %v997 = vunpack.c.0.s8 %v996
    %v998 = vperm.slane %v992, %v997
    %v1000 = vunpack.c.l.s4 1934713408
    %v1001 = vunpack.c.0.s8 %v1000
    %v1002 = vperm.slane %v994, %v1001
    %v1003 = vrot.slane %v966, 4
    %v1004 = vsel %vm196, %v1003, %v954
    %v1005 = vrot.slane %v954, 4
    %v1006 = vsel %vm196, %v966, %v1005
    %v1008 = vunpack.c.l.s4 1934713408
    %v1009 = vunpack.c.0.s8 %v1008
    %v1010 = vperm.slane %v1004, %v1009
    %v1012 = vunpack.c.l.s4 1934713408
    %v1013 = vunpack.c.0.s8 %v1012
    %v1014 = vperm.slane %v1006, %v1013
    %v1015 = vrot.slane %v986, 4
    %v1016 = vsel %vm196, %v1015, %v974
    %v1017 = vrot.slane %v974, 4
    %v1018 = vsel %vm196, %v986, %v1017
    %v1020 = vunpack.c.l.s4 1934713408
    %v1021 = vunpack.c.0.s8 %v1020
    %v1022 = vperm.slane %v1016, %v1021
    %v1024 = vunpack.c.l.s4 1934713408
    %v1025 = vunpack.c.0.s8 %v1024
    %v1026 = vperm.slane %v1018, %v1025
    %v1027 = vrot.slane %v990, 4
    %v1028 = vsel %vm196, %v1027, %v978
    %v1029 = vrot.slane %v978, 4
    %v1030 = vsel %vm196, %v990, %v1029
    %v1032 = vunpack.c.l.s4 1934713408
    %v1033 = vunpack.c.0.s8 %v1032
    %v1034 = vperm.slane %v1028, %v1033
    %v1036 = vunpack.c.l.s4 1934713408
    %v1037 = vunpack.c.0.s8 %v1036
    %v1038 = vperm.slane %v1030, %v1037
    %v1039 = vrot.slane %v1022, 4
    %v1040 = vsel %vm196, %v1039, %v998
    %v1041 = vrot.slane %v998, 4
    %v1042 = vsel %vm196, %v1022, %v1041
    %v1043 = vrot.slane %v1026, 4
    %v1044 = vsel %vm196, %v1043, %v1002
    %v1045 = vrot.slane %v1002, 4
    %v1046 = vsel %vm196, %v1026, %v1045
    %v1047 = vrot.slane %v1034, 4
    %v1048 = vsel %vm196, %v1047, %v1010
    %v1049 = vrot.slane %v1010, 4
    %v1050 = vsel %vm196, %v1034, %v1049
    %v1051 = vrot.slane %v1038, 4
    %v1052 = vsel %vm196, %v1051, %v1014
    %v1053 = vrot.slane %v1014, 4
    %v1054 = vsel %vm196, %v1038, %v1053
    %v1055 = vrot.slane %v910, 4
    %v1056 = vsel %vm196, %v1055, %v897
    %v1057 = vrot.slane %v897, 4
    %v1058 = vsel %vm196, %v910, %v1057
    %v1060 = vunpack.c.l.s4 1983009808
    %v1061 = vunpack.c.0.s8 %v1060
    %v1062 = vperm.slane %v1056, %v1061
    %v1064 = vunpack.c.l.s4 1983009808
    %v1065 = vunpack.c.0.s8 %v1064
    %v1066 = vperm.slane %v1058, %v1065
    %v1067 = vrot.slane %v916, 4
    %v1068 = vsel %vm196, %v1067, %v904
    %v1069 = vrot.slane %v904, 4
    %v1070 = vsel %vm196, %v916, %v1069
    %v1072 = vunpack.c.l.s4 1983009808
    %v1073 = vunpack.c.0.s8 %v1072
    %v1074 = vperm.slane %v1068, %v1073
    %v1076 = vunpack.c.l.s4 1983009808
    %v1077 = vunpack.c.0.s8 %v1076
    %v1078 = vperm.slane %v1070, %v1077
    %v1079 = vrot.slane %v934, 4
    %v1080 = vsel %vm196, %v1079, %v922
    %v1081 = vrot.slane %v922, 4
    %v1082 = vsel %vm196, %v934, %v1081
    %v1084 = vunpack.c.l.s4 1983009808
    %v1085 = vunpack.c.0.s8 %v1084
    %v1086 = vperm.slane %v1080, %v1085
    %v1088 = vunpack.c.l.s4 1983009808
    %v1089 = vunpack.c.0.s8 %v1088
    %v1090 = vperm.slane %v1082, %v1089
    %v1091 = vrot.slane %v940, 4
    %v1092 = vsel %vm196, %v1091, %v928
    %v1093 = vrot.slane %v928, 4
    %v1094 = vsel %vm196, %v940, %v1093
    %v1096 = vunpack.c.l.s4 1983009808
    %v1097 = vunpack.c.0.s8 %v1096
    %v1098 = vperm.slane %v1092, %v1097
    %v1100 = vunpack.c.l.s4 1983009808
    %v1101 = vunpack.c.0.s8 %v1100
    %v1102 = vperm.slane %v1094, %v1101
    %v1103 = vrot.slane %v1074, 4
    %v1104 = vsel %vm196, %v1103, %v1062
    %v1105 = vrot.slane %v1062, 4
    %v1106 = vsel %vm196, %v1074, %v1105
    %v1108 = vunpack.c.l.s4 1934713408
    %v1109 = vunpack.c.0.s8 %v1108
    %v1110 = vperm.slane %v1104, %v1109
    %v1112 = vunpack.c.l.s4 1934713408
    %v1113 = vunpack.c.0.s8 %v1112
    %v1114 = vperm.slane %v1106, %v1113
    %v1115 = vrot.slane %v1078, 4
    %v1116 = vsel %vm196, %v1115, %v1066
    %v1118 = vunpack.c.l.s4 1934713408
    %v1119 = vunpack.c.0.s8 %v1118
    %v1120 = vperm.slane %v1116, %v1119
    %v1121 = vrot.slane %v1098, 4
    %v1122 = vsel %vm196, %v1121, %v1086
    %v1123 = vrot.slane %v1086, 4
    %v1124 = vsel %vm196, %v1098, %v1123
    %v1126 = vunpack.c.l.s4 1934713408
    %v1127 = vunpack.c.0.s8 %v1126
    %v1128 = vperm.slane %v1122, %v1127
    %v1130 = vunpack.c.l.s4 1934713408
    %v1131 = vunpack.c.0.s8 %v1130
    %v1132 = vperm.slane %v1124, %v1131
    %v1133 = vrot.slane %v1102, 4
    %v1134 = vsel %vm196, %v1133, %v1090
    %v1136 = vunpack.c.l.s4 1934713408
    %v1137 = vunpack.c.0.s8 %v1136
    %v1138 = vperm.slane %v1134, %v1137
    %v1139 = vrot.slane %v1128, 4
    %v1140 = vsel %vm196, %v1139, %v1110
    %v1141 = vrot.slane %v1110, 4
    %v1142 = vsel %vm196, %v1128, %v1141
    %v1143 = vrot.slane %v1132, 4
    %v1144 = vsel %vm196, %v1143, %v1114
    %v1145 = vrot.slane %v1114, 4
    %v1146 = vsel %vm196, %v1132, %v1145
    %v1147 = vrot.slane %v1138, 4
    %v1148 = vsel %vm196, %v1147, %v1120
    %v1149 = vrot.slane %v1044, 4
    %v1150 = vsel %vm196, %v1149, %v1040
    %v1151 = vrot.slane %v1040, 4
    %v1152 = vsel %vm196, %v1044, %v1151
    %v1154 = vunpack.c.l.s4 1983009808
    %v1155 = vunpack.c.0.s8 %v1154
    %v1156 = vperm.slane %v1150, %v1155
    %v1158 = vunpack.c.l.s4 1983009808
    %v1159 = vunpack.c.0.s8 %v1158
    %v1160 = vperm.slane %v1152, %v1159
    %v1161 = vrot.slane %v1046, 4
    %v1162 = vsel %vm196, %v1161, %v1042
    %v1163 = vrot.slane %v1042, 4
    %v1164 = vsel %vm196, %v1046, %v1163
    %v1166 = vunpack.c.l.s4 1983009808
    %v1167 = vunpack.c.0.s8 %v1166
    %v1168 = vperm.slane %v1162, %v1167
    %v1170 = vunpack.c.l.s4 1983009808
    %v1171 = vunpack.c.0.s8 %v1170
    %v1172 = vperm.slane %v1164, %v1171
    %v1173 = vrot.slane %v1052, 4
    %v1174 = vsel %vm196, %v1173, %v1048
    %v1175 = vrot.slane %v1048, 4
    %v1176 = vsel %vm196, %v1052, %v1175
    %v1178 = vunpack.c.l.s4 1983009808
    %v1179 = vunpack.c.0.s8 %v1178
    %v1180 = vperm.slane %v1174, %v1179
    %v1182 = vunpack.c.l.s4 1983009808
    %v1183 = vunpack.c.0.s8 %v1182
    %v1184 = vperm.slane %v1176, %v1183
    %v1185 = vrot.slane %v1054, 4
    %v1186 = vsel %vm196, %v1185, %v1050
    %v1187 = vrot.slane %v1050, 4
    %v1188 = vsel %vm196, %v1054, %v1187
    %v1190 = vunpack.c.l.s4 1983009808
    %v1191 = vunpack.c.0.s8 %v1190
    %v1192 = vperm.slane %v1186, %v1191
    %v1194 = vunpack.c.l.s4 1983009808
    %v1195 = vunpack.c.0.s8 %v1194
    %v1196 = vperm.slane %v1188, %v1195
    %v1197 = vrot.slane %v1168, 4
    %v1198 = vsel %vm196, %v1197, %v1156
    %v1199 = vrot.slane %v1156, 4
    %v1200 = vsel %vm196, %v1168, %v1199
    %v1202 = vunpack.c.l.s4 1934713408
    %v1203 = vunpack.c.0.s8 %v1202
    %v1204 = vperm.slane %v1198, %v1203
    %v1206 = vunpack.c.l.s4 1934713408
    %v1207 = vunpack.c.0.s8 %v1206
    %v1208 = vperm.slane %v1200, %v1207
    %v1209 = vrot.slane %v1172, 4
    %v1210 = vsel %vm196, %v1209, %v1160
    %v1211 = vrot.slane %v1160, 4
    %v1212 = vsel %vm196, %v1172, %v1211
    %v1214 = vunpack.c.l.s4 1934713408
    %v1215 = vunpack.c.0.s8 %v1214
    %v1216 = vperm.slane %v1210, %v1215
    %v1218 = vunpack.c.l.s4 1934713408
    %v1219 = vunpack.c.0.s8 %v1218
    %v1220 = vperm.slane %v1212, %v1219
    %v1221 = vrot.slane %v1192, 4
    %v1222 = vsel %vm196, %v1221, %v1180
    %v1223 = vrot.slane %v1180, 4
    %v1224 = vsel %vm196, %v1192, %v1223
    %v1226 = vunpack.c.l.s4 1934713408
    %v1227 = vunpack.c.0.s8 %v1226
    %v1228 = vperm.slane %v1222, %v1227
    %v1230 = vunpack.c.l.s4 1934713408
    %v1231 = vunpack.c.0.s8 %v1230
    %v1232 = vperm.slane %v1224, %v1231
    %v1233 = vrot.slane %v1196, 4
    %v1234 = vsel %vm196, %v1233, %v1184
    %v1235 = vrot.slane %v1184, 4
    %v1236 = vsel %vm196, %v1196, %v1235
    %v1238 = vunpack.c.l.s4 1934713408
    %v1239 = vunpack.c.0.s8 %v1238
    %v1240 = vperm.slane %v1234, %v1239
    %v1242 = vunpack.c.l.s4 1934713408
    %v1243 = vunpack.c.0.s8 %v1242
    %v1244 = vperm.slane %v1236, %v1243
    %v1245 = vrot.slane %v1228, 4
    %v1246 = vsel %vm196, %v1245, %v1204
    %v1247 = vrot.slane %v1204, 4
    %v1248 = vsel %vm196, %v1228, %v1247
    %v1249 = vrot.slane %v1232, 4
    %v1250 = vsel %vm196, %v1249, %v1208
    %v1251 = vrot.slane %v1208, 4
    %v1252 = vsel %vm196, %v1232, %v1251
    %v1253 = vrot.slane %v1240, 4
    %v1254 = vsel %vm196, %v1253, %v1216
    %v1255 = vrot.slane %v1216, 4
    %v1256 = vsel %vm196, %v1240, %v1255
    %v1257 = vrot.slane %v1244, 4
    %v1258 = vsel %vm196, %v1257, %v1220
    %v1259 = vrot.slane %v1220, 4
    %v1260 = vsel %vm196, %v1244, %v1259
    %v1261 = vrot.slane %v1144, 4
    %v1262 = vsel %vm196, %v1261, %v1140
    %v1263 = vrot.slane %v1140, 4
    %v1264 = vsel %vm196, %v1144, %v1263
    %v1266 = vunpack.c.l.s4 1983009808
    %v1267 = vunpack.c.0.s8 %v1266
    %v1268 = vperm.slane %v1262, %v1267
    %v1270 = vunpack.c.l.s4 1983009808
    %v1271 = vunpack.c.0.s8 %v1270
    %v1272 = vperm.slane %v1264, %v1271
    %v1273 = vrot.slane %v1146, 4
    %v1274 = vsel %vm196, %v1273, %v1142
    %v1275 = vrot.slane %v1142, 4
    %v1276 = vsel %vm196, %v1146, %v1275
    %v1278 = vunpack.c.l.s4 1983009808
    %v1279 = vunpack.c.0.s8 %v1278
    %v1280 = vperm.slane %v1274, %v1279
    %v1282 = vunpack.c.l.s4 1983009808
    %v1283 = vunpack.c.0.s8 %v1282
    %v1284 = vperm.slane %v1276, %v1283
    %v1285 = vrot.slane %v1148, 4
    %v1286 = vsel %vm196, 0.0, %v1285
    %v1288 = vunpack.c.l.s4 1983009808
    %v1289 = vunpack.c.0.s8 %v1288
    %v1290 = vperm.slane %v1148, %v1289
    %v1292 = vunpack.c.l.s4 1983009808
    %v1293 = vunpack.c.0.s8 %v1292
    %v1294 = vperm.slane %v1286, %v1293
    %v1295 = vrot.slane %v1280, 4
    %v1296 = vsel %vm196, %v1295, %v1268
    %v1297 = vrot.slane %v1268, 4
    %v1298 = vsel %vm196, %v1280, %v1297
    %v1300 = vunpack.c.l.s4 1934713408
    %v1301 = vunpack.c.0.s8 %v1300
    %v1302 = vperm.slane %v1296, %v1301
    %v1304 = vunpack.c.l.s4 1934713408
    %v1305 = vunpack.c.0.s8 %v1304
    %v1306 = vperm.slane %v1298, %v1305
    %v1307 = vrot.slane %v1284, 4
    %v1308 = vsel %vm196, %v1307, %v1272
    %v1309 = vrot.slane %v1272, 4
    %v1310 = vsel %vm196, %v1284, %v1309
    %v1312 = vunpack.c.l.s4 1934713408
    %v1313 = vunpack.c.0.s8 %v1312
    %v1314 = vperm.slane %v1308, %v1313
    %v1316 = vunpack.c.l.s4 1934713408
    %v1317 = vunpack.c.0.s8 %v1316
    %v1318 = vperm.slane %v1310, %v1317
    %v1319 = vrot.slane %v1290, 4
    %v1320 = vsel %vm196, 0.0, %v1319
    %v1322 = vunpack.c.l.s4 1934713408
    %v1323 = vunpack.c.0.s8 %v1322
    %v1324 = vperm.slane %v1290, %v1323
    %v1326 = vunpack.c.l.s4 1934713408
    %v1327 = vunpack.c.0.s8 %v1326
    %v1328 = vperm.slane %v1320, %v1327
    %v1329 = vrot.slane %v1294, 4
    %v1330 = vsel %vm196, 0.0, %v1329
    %v1332 = vunpack.c.l.s4 1934713408
    %v1333 = vunpack.c.0.s8 %v1332
    %v1334 = vperm.slane %v1294, %v1333
    %v1336 = vunpack.c.l.s4 1934713408
    %v1337 = vunpack.c.0.s8 %v1336
    %v1338 = vperm.slane %v1330, %v1337
    %v1339 = vrot.slane %v1324, 4
    %v1340 = vsel %vm196, %v1339, %v1302
    %v1341 = vrot.slane %v1302, 4
    %v1342 = vsel %vm196, %v1324, %v1341
    %v1343 = vrot.slane %v1328, 4
    %v1344 = vsel %vm196, %v1343, %v1306
    %v1345 = vrot.slane %v1306, 4
    %v1346 = vsel %vm196, %v1328, %v1345
    %v1347 = vrot.slane %v1334, 4
    %v1348 = vsel %vm196, %v1347, %v1314
    %v1349 = vrot.slane %v1314, 4
    %v1350 = vsel %vm196, %v1334, %v1349
    %v1351 = vrot.slane %v1338, 4
    %v1352 = vsel %vm196, %v1351, %v1318
    %v1353 = vrot.slane %v1318, 4
    %v1354 = vsel %vm196, %v1338, %v1353
    %1355 = vst.msk [vmem:[%s3] sm:$0xff] %vm700, %v1246
    %vm1356 = vcmask 102400
    %1357 = vst.msk [vmem:[%s3 + $0x8] sm:$0x1f] %vm1356, %v1340
    %1358 = vst.msk [vmem:[%s3 + $0x10] sm:$0xff] %vm700, %v1248
    %1359 = vst.msk [vmem:[%s3 + $0x18] sm:$0x1f] %vm1356, %v1342
    %1360 = vst.msk [vmem:[%s3 + $0x20] sm:$0xff] %vm700, %v1250
    %1361 = vst.msk [vmem:[%s3 + $0x28] sm:$0x1f] %vm1356, %v1344
    %1362 = vst.msk [vmem:[%s3 + $0x30] sm:$0xff] %vm700, %v1252
    %1363 = vst.msk [vmem:[%s3 + $0x38] sm:$0x1f] %vm1356, %v1346
    %1364 = vst.msk [vmem:[%s3 + $0x40] sm:$0xff] %vm700, %v1254
    %1365 = vst.msk [vmem:[%s3 + $0x48] sm:$0x1f] %vm1356, %v1348
    %1366 = vst.msk [vmem:[%s3 + $0x50] sm:$0xff] %vm700, %v1256
    %1367 = vst.msk [vmem:[%s3 + $0x58] sm:$0x1f] %vm1356, %v1350
    %1368 = vst.msk [vmem:[%s3 + $0x60] sm:$0xff] %vm700, %v1258
    %1369 = vst.msk [vmem:[%s3 + $0x68] sm:$0x1f] %vm1356, %v1352
    %1370 = vst.msk [vmem:[%s3 + $0x70] sm:$0xff] %vm700, %v1260
    %1371 = vst.msk [vmem:[%s3 + $0x78] sm:$0x1f] %vm1356, %v1354
    // Predicated region
    $region26: #{tpu_custom_call.1} parent=1 // pred_check
      _
    $region27: #{tpu_custom_call.1} parent=1 // pred_check_branch
      %1373 = sbr.rel (0) target = $region29
    $region28: #{tpu_custom_call.1} parent=1 // pred_region
      _
    $region29: #{tpu_custom_call.1} parent=1 // pred_fallthru
      _
    // Predicated region
    $region30: #{tpu_custom_call.1} parent=1 // pred_check
      _
    $region31: #{tpu_custom_call.1} parent=1 // pred_check_branch
      %1375 = sbr.rel (0) target = $region33
    $region32: #{tpu_custom_call.1} parent=1 // pred_region
      _
    $region33: #{tpu_custom_call.1} parent=1 // pred_fallthru
      _
    %1376 = vsyncpa [#allocation3], 1
    %1377 = vsyncpa [#allocation5], 1

// kernel: tpu_custom_call.1
$region0: #{tpu_custom_call.1}
  #allocation0 [shape = 'u32[]', space=smem, size = 0x4, offset = 0x4, fixed_abs, tag = 'smem constant byte address 0x4 - core index']
  #allocation1 [shape = 'u32[72,128]{1,0:T(1,128)}', space=vmem, size = 0x9000, scoped, tag = 'internal scratch']
  %s0 = inlined_call_operand.hbm [shape: f32[13,16], index: 0, kind: input, shape index: {}]
  %s1 = inlined_call_operand.hbm [shape: f32[16,13], index: 1, kind: input, shape index: {}]
  %s2 = inlined_call_operand.hbm [shape: f32[8,16,16], index: 2, kind: input, shape index: {}]
  %s3 = inlined_call_operand.vmem [shape: f32[8,13,13], index: 3, kind: output, shape index: {}]
  %s4 = sld [smem:[#allocation0]]
  $region34: #{tpu_custom_call.1} parent=0
    _
  %s6 = ssub.s32 1, %s4
  %s7 = scalar_select 0, %s6, %s4
  $region1: #{tpu_custom_call.1} parent=0
    #allocation2 [shape = 'u8[8192]{0}', space=vmem, size = 0x2000, scoped, tag = 'input window, operand 0, single buffered']
    #allocation3 [shape = 's32[1]{0}', space=sflag, size = 0x4, scoped, tag = 'scoped memory for tpu_custom_call.1']
    #allocation4 [shape = 'u8[8192]{0}', space=vmem, size = 0x2000, scoped, tag = 'input window, operand 1, single buffered']
    #allocation5 [shape = 's32[1]{0}', space=sflag, size = 0x4, scoped, tag = 'scoped memory for tpu_custom_call.1']
    #allocation6 [shape = 'u8[65536]{0}', space=vmem, size = 0x10000, scoped, tag = 'input window, operand 2, single buffered']
    %8 = vsyncpa [#allocation3], 0
    %9 = vsyncpa [#allocation5], 0
    // Predicated region
    $region2: #{tpu_custom_call.1} parent=1 // pred_check
      _
    $region3: #{tpu_custom_call.1} parent=1 // pred_check_branch
      %11 = sbr.rel (0) target = $region5
    $region4: #{tpu_custom_call.1} parent=1 // pred_region
      %13 = vsyncadd [#allocation3], 0
      %s14 = sshll.u32 %s0, 4
      %s15 = int_to_ptr.hbm [resolvable:$true] %s14
      %s16 = sshll.u32 [#allocation2], 4
      %s17 = int_to_ptr.vmem [resolvable:$true] %s16
      %22 = dma.hbm_to_vmem [thread:$0]  %s15, 256, %s17, [#allocation3], 128, 128, 8
    $region5: #{tpu_custom_call.1} parent=1 // pred_fallthru
      _
    // Predicated region
    $region6: #{tpu_custom_call.1} parent=1 // pred_check
      _
    $region7: #{tpu_custom_call.1} parent=1 // pred_check_branch
      %24 = sbr.rel (0) target = $region9
    $region8: #{tpu_custom_call.1} parent=1 // pred_region
      %26 = vsyncadd [#allocation5], 0
      %s27 = sshll.u32 %s1, 4
      %s28 = int_to_ptr.hbm [resolvable:$true] %s27
      %s29 = sshll.u32 [#allocation4], 4
      %s30 = int_to_ptr.vmem [resolvable:$true] %s29
      %35 = dma.hbm_to_vmem [thread:$0]  %s28, 256, %s30, [#allocation5], 128, 128, 8
    $region9: #{tpu_custom_call.1} parent=1 // pred_fallthru
      _
    // Predicated region
    $region10: #{tpu_custom_call.1} parent=1 // pred_check
      _
    $region11: #{tpu_custom_call.1} parent=1 // pred_check_branch
      %37 = sbr.rel (0) target = $region13
    $region12: #{tpu_custom_call.1} parent=1 // pred_region
      %39 = vsyncadd [#allocation5], 0
      %s40 = sshll.u32 %s2, 4
      %s41 = int_to_ptr.hbm [resolvable:$true] %s40
      %s42 = sshll.u32 [#allocation6], 4
      %s43 = int_to_ptr.vmem [resolvable:$true] %s42
      %48 = dma.hbm_to_vmem [thread:$0]  %s41, 2048, %s43, [#allocation5], 128, 128, 8
    $region13: #{tpu_custom_call.1} parent=1 // pred_fallthru
      _
    // Predicated region
    $region14: #{tpu_custom_call.1} parent=1 // pred_check
      _
    $region15: #{tpu_custom_call.1} parent=1 // pred_check_branch
      %50 = sbr.rel (0) target = $region17
    $region16: #{tpu_custom_call.1} parent=1 // pred_region
      %52 = dma.done [#allocation3], 256
    $region17: #{tpu_custom_call.1} parent=1 // pred_fallthru
      _
    // Predicated region
    $region18: #{tpu_custom_call.1} parent=1 // pred_check
      _
    $region19: #{tpu_custom_call.1} parent=1 // pred_check_branch
      %54 = sbr.rel (0) target = $region21
    $region20: #{tpu_custom_call.1} parent=1 // pred_region
      %56 = dma.done [#allocation5], 256
    $region21: #{tpu_custom_call.1} parent=1 // pred_fallthru
      _
    // Predicated region
    $region22: #{tpu_custom_call.1} parent=1 // pred_check
      _
    $region23: #{tpu_custom_call.1} parent=1 // pred_check_branch
      %58 = sbr.rel (0) target = $region25
    $region24: #{tpu_custom_call.1} parent=1 // pred_region
      %60 = dma.done [#allocation5], 2048
    $region25: #{tpu_custom_call.1} parent=1 // pred_fallthru
      _
    %v61 = vld [vmem:[#allocation6] sm:$0xff]
    %v62 = vld [vmem:[#allocation6 + $0x8] sm:$0xff]
    %v63 = vld [vmem:[#allocation6 + $0x10] sm:$0xff]
    %v64 = vld [vmem:[#allocation6 + $0x18] sm:$0xff]
    %v65 = vld [vmem:[#allocation6 + $0x20] sm:$0xff]
    %v66 = vld [vmem:[#allocation6 + $0x28] sm:$0xff]
    %v67 = vld [vmem:[#allocation6 + $0x30] sm:$0xff]
    %v68 = vld [vmem:[#allocation6 + $0x38] sm:$0xff]
    %v69 = vld [vmem:[#allocation6 + $0x40] sm:$0xff]
    %v70 = vld [vmem:[#allocation6 + $0x48] sm:$0xff]
    %v71 = vld [vmem:[#allocation6 + $0x50] sm:$0xff]
    %v72 = vld [vmem:[#allocation6 + $0x58] sm:$0xff]
    %v73 = vld [vmem:[#allocation6 + $0x60] sm:$0xff]
    %v74 = vld [vmem:[#allocation6 + $0x68] sm:$0xff]
    %v75 = vld [vmem:[#allocation6 + $0x70] sm:$0xff]
    %v76 = vld [vmem:[#allocation6 + $0x78] sm:$0xff]
    %v77 = vld [vmem:[#allocation4] sm:$0xff]
    %v78 = vld [vmem:[#allocation4 + $0x8] sm:$0xff]
    %vm79 = vcmask 130048
    %v81 = vsel %vm79, %v61, 0
    %v84 = vsel %vm79, %v62, 0
    %v87 = vsel %vm79, %v63, 0
    %v90 = vsel %vm79, %v64, 0
    %v93 = vsel %vm79, %v65, 0
    %v96 = vsel %vm79, %v66, 0
    %v99 = vsel %vm79, %v67, 0
    %v102 = vsel %vm79, %v68, 0
    %v105 = vsel %vm79, %v69, 0
    %v108 = vsel %vm79, %v70, 0
    %v111 = vsel %vm79, %v71, 0
    %v114 = vsel %vm79, %v72, 0
    %v117 = vsel %vm79, %v73, 0
    %v120 = vsel %vm79, %v74, 0
    %v123 = vsel %vm79, %v75, 0
    %v126 = vsel %vm79, %v76, 0
    %128 = vmatpush.msra.mxu0 0.0
    %129 = vmatpush.msra.mxu0 0.0
    %130 = vmatpush.msra.mxu0 0.0
    %131 = vmatpush.msra.mxu0 0.0
    %132 = vmatpush.msra.mxu0 0.0
    %133 = vmatpush.msra.mxu0 0.0
    %134 = vmatpush.msra.mxu0 0.0
    %135 = vmatpush.msra.mxu0 0.0
    %136 = vmatpush.msra.mxu0 0.0
    %137 = vmatpush.msra.mxu0 0.0
    %138 = vmatpush.msra.mxu0 0.0
    %139 = vmatpush.msra.mxu0 0.0
    %140 = vmatpush.msra.mxu0 0.0
    %141 = vmatpush.msra.mxu0 0.0
    %142 = vmatpush.msra.mxu0 %v78
    %143 = vmatpush.msra.mxu0 %v77
    %144 = vmatmul.f32.gmra.mxu0 %v81
    %v145 = vpop.f32.mrf.mxu0
    %v146 = vadd.f32 0.0, %v145
    %147 = vmatmul.f32.gmra.mxu0 %v84
    %v148 = vpop.f32.mrf.mxu0
    %v149 = vadd.f32 0.0, %v148
    %150 = vmatmul.f32.gmra.mxu0 %v87
    %v151 = vpop.f32.mrf.mxu0
    %v152 = vadd.f32 0.0, %v151
    %153 = vmatmul.f32.gmra.mxu0 %v90
    %v154 = vpop.f32.mrf.mxu0
    %v155 = vadd.f32 0.0, %v154
    %156 = vmatmul.f32.gmra.mxu0 %v93
    %v157 = vpop.f32.mrf.mxu0
    %v158 = vadd.f32 0.0, %v157
    %159 = vmatmul.f32.gmra.mxu0 %v96
    %v160 = vpop.f32.mrf.mxu0
    %v161 = vadd.f32 0.0, %v160
    %162 = vmatmul.f32.gmra.mxu0 %v99
    %v163 = vpop.f32.mrf.mxu0
    %v164 = vadd.f32 0.0, %v163
    %165 = vmatmul.f32.gmra.mxu0 %v102
    %v166 = vpop.f32.mrf.mxu0
    %v167 = vadd.f32 0.0, %v166
    %168 = vmatmul.f32.gmra.mxu0 %v105
    %v169 = vpop.f32.mrf.mxu0
    %v170 = vadd.f32 0.0, %v169
    %171 = vmatmul.f32.gmra.mxu0 %v108
    %v172 = vpop.f32.mrf.mxu0
    %v173 = vadd.f32 0.0, %v172
    %174 = vmatmul.f32.gmra.mxu0 %v111
    %v175 = vpop.f32.mrf.mxu0
    %v176 = vadd.f32 0.0, %v175
    %177 = vmatmul.f32.gmra.mxu0 %v114
    %v178 = vpop.f32.mrf.mxu0
    %v179 = vadd.f32 0.0, %v178
    %180 = vmatmul.f32.gmra.mxu0 %v117
    %v181 = vpop.f32.mrf.mxu0
    %v182 = vadd.f32 0.0, %v181
    %183 = vmatmul.f32.gmra.mxu0 %v120
    %v184 = vpop.f32.mrf.mxu0
    %v185 = vadd.f32 0.0, %v184
    %186 = vmatmul.f32.gmra.mxu0 %v123
    %v187 = vpop.f32.mrf.mxu0
    %v188 = vadd.f32 0.0, %v187
    %189 = vmatmul.f32.gmra.mxu0 %v126
    %v190 = vpop.f32.mrf.mxu0
    %v191 = vadd.f32 0.0, %v190
    %192 = vdwg.mxu0
    %v193 = vld [vmem:[#allocation2] sm:$0xff]
    %v194 = vld [vmem:[#allocation2 + $0x8] sm:$0x1f]
    %v195 = vrot.slane %v158, 4
    %vm196 = vcmask 1047556
    %v197 = vsel %vm196, %v195, %v146
    %v198 = vrot.slane %v146, 4
    %v199 = vsel %vm196, %v158, %v198
    %v201 = vunpack.c.l.s4 1983009808
    %v202 = vunpack.c.0.s8 %v201
    %v203 = vperm.slane %v197, %v202
    %v205 = vunpack.c.l.s4 1983009808
    %v206 = vunpack.c.0.s8 %v205
    %v207 = vperm.slane %v199, %v206
    %v208 = vrot.slane %v164, 4
    %v209 = vsel %vm196, %v208, %v152
    %v210 = vrot.slane %v152, 4
    %v211 = vsel %vm196, %v164, %v210
    %v213 = vunpack.c.l.s4 1983009808
    %v214 = vunpack.c.0.s8 %v213
    %v215 = vperm.slane %v209, %v214
    %v217 = vunpack.c.l.s4 1983009808
    %v218 = vunpack.c.0.s8 %v217
    %v219 = vperm.slane %v211, %v218
    %v220 = vrot.slane %v182, 4
    %v221 = vsel %vm196, %v220, %v170
    %v222 = vrot.slane %v170, 4
    %v223 = vsel %vm196, %v182, %v222
    %v225 = vunpack.c.l.s4 1983009808
    %v226 = vunpack.c.0.s8 %v225
    %v227 = vperm.slane %v221, %v226
    %v229 = vunpack.c.l.s4 1983009808
    %v230 = vunpack.c.0.s8 %v229
    %v231 = vperm.slane %v223, %v230
    %v232 = vrot.slane %v188, 4
    %v233 = vsel %vm196, %v232, %v176
    %v234 = vrot.slane %v176, 4
    %v235 = vsel %vm196, %v188, %v234
    %v237 = vunpack.c.l.s4 1983009808
    %v238 = vunpack.c.0.s8 %v237
    %v239 = vperm.slane %v233, %v238
    %v241 = vunpack.c.l.s4 1983009808
    %v242 = vunpack.c.0.s8 %v241
    %v243 = vperm.slane %v235, %v242
    %v244 = vrot.slane %v215, 4
    %v245 = vsel %vm196, %v244, %v203
    %v246 = vrot.slane %v203, 4
    %v247 = vsel %vm196, %v215, %v246
    %v249 = vunpack.c.l.s4 1934713408
    %v250 = vunpack.c.0.s8 %v249
    %v251 = vperm.slane %v245, %v250
    %v253 = vunpack.c.l.s4 1934713408
    %v254 = vunpack.c.0.s8 %v253
    %v255 = vperm.slane %v247, %v254
    %v256 = vrot.slane %v219, 4
    %v257 = vsel %vm196, %v256, %v207
    %v258 = vrot.slane %v207, 4
    %v259 = vsel %vm196, %v219, %v258
    %v261 = vunpack.c.l.s4 1934713408
    %v262 = vunpack.c.0.s8 %v261
    %v263 = vperm.slane %v257, %v262
    %v265 = vunpack.c.l.s4 1934713408
    %v266 = vunpack.c.0.s8 %v265
    %v267 = vperm.slane %v259, %v266
    %v268 = vrot.slane %v239, 4
    %v269 = vsel %vm196, %v268, %v227
    %v270 = vrot.slane %v227, 4
    %v271 = vsel %vm196, %v239, %v270
    %v273 = vunpack.c.l.s4 1934713408
    %v274 = vunpack.c.0.s8 %v273
    %v275 = vperm.slane %v269, %v274
    %v277 = vunpack.c.l.s4 1934713408
    %v278 = vunpack.c.0.s8 %v277
    %v279 = vperm.slane %v271, %v278
    %v280 = vrot.slane %v243, 4
    %v281 = vsel %vm196, %v280, %v231
    %v282 = vrot.slane %v231, 4
    %v283 = vsel %vm196, %v243, %v282
    %v285 = vunpack.c.l.s4 1934713408
    %v286 = vunpack.c.0.s8 %v285
    %v287 = vperm.slane %v281, %v286
    %v289 = vunpack.c.l.s4 1934713408
    %v290 = vunpack.c.0.s8 %v289
    %v291 = vperm.slane %v283, %v290
    %v292 = vrot.slane %v275, 4
    %v293 = vsel %vm196, %v292, %v251
    %v294 = vrot.slane %v251, 4
    %v295 = vsel %vm196, %v275, %v294
    %v296 = vrot.slane %v279, 4
    %v297 = vsel %vm196, %v296, %v255
    %v298 = vrot.slane %v255, 4
    %v299 = vsel %vm196, %v279, %v298
    %v300 = vrot.slane %v287, 4
    %v301 = vsel %vm196, %v300, %v263
    %v302 = vrot.slane %v263, 4
    %v303 = vsel %vm196, %v287, %v302
    %v304 = vrot.slane %v291, 4
    %v305 = vsel %vm196, %v304, %v267
    %v306 = vrot.slane %v267, 4
    %v307 = vsel %vm196, %v291, %v306
    %v308 = vrot.slane %v161, 4
    %v309 = vsel %vm196, %v308, %v149
    %v310 = vrot.slane %v149, 4
    %v311 = vsel %vm196, %v161, %v310
    %v313 = vunpack.c.l.s4 1983009808
    %v314 = vunpack.c.0.s8 %v313
    %v315 = vperm.slane %v309, %v314
    %v317 = vunpack.c.l.s4 1983009808
    %v318 = vunpack.c.0.s8 %v317
    %v319 = vperm.slane %v311, %v318
    %v320 = vrot.slane %v167, 4
    %v321 = vsel %vm196, %v320, %v155
    %v322 = vrot.slane %v155, 4
    %v323 = vsel %vm196, %v167, %v322
    %v325 = vunpack.c.l.s4 1983009808
    %v326 = vunpack.c.0.s8 %v325
    %v327 = vperm.slane %v321, %v326
    %v329 = vunpack.c.l.s4 1983009808
    %v330 = vunpack.c.0.s8 %v329
    %v331 = vperm.slane %v323, %v330
    %v332 = vrot.slane %v185, 4
    %v333 = vsel %vm196, %v332, %v173
    %v334 = vrot.slane %v173, 4
    %v335 = vsel %vm196, %v185, %v334
    %v337 = vunpack.c.l.s4 1983009808
    %v338 = vunpack.c.0.s8 %v337
    %v339 = vperm.slane %v333, %v338
    %v341 = vunpack.c.l.s4 1983009808
    %v342 = vunpack.c.0.s8 %v341
    %v343 = vperm.slane %v335, %v342
    %v344 = vrot.slane %v191, 4
    %v345 = vsel %vm196, %v344, %v179
    %v346 = vrot.slane %v179, 4
    %v347 = vsel %vm196, %v191, %v346
    %v349 = vunpack.c.l.s4 1983009808
    %v350 = vunpack.c.0.s8 %v349
    %v351 = vperm.slane %v345, %v350
    %v353 = vunpack.c.l.s4 1983009808
    %v354 = vunpack.c.0.s8 %v353
    %v355 = vperm.slane %v347, %v354
    %v356 = vrot.slane %v327, 4
    %v357 = vsel %vm196, %v356, %v315
    %v358 = vrot.slane %v315, 4
    %v359 = vsel %vm196, %v327, %v358
    %v361 = vunpack.c.l.s4 1934713408
    %v362 = vunpack.c.0.s8 %v361
    %v363 = vperm.slane %v357, %v362
    %v365 = vunpack.c.l.s4 1934713408
    %v366 = vunpack.c.0.s8 %v365
    %v367 = vperm.slane %v359, %v366
    %v368 = vrot.slane %v331, 4
    %v369 = vsel %vm196, %v368, %v319
    %v370 = vrot.slane %v319, 4
    %v371 = vsel %vm196, %v331, %v370
    %v373 = vunpack.c.l.s4 1934713408
    %v374 = vunpack.c.0.s8 %v373
    %v375 = vperm.slane %v369, %v374
    %v377 = vunpack.c.l.s4 1934713408
    %v378 = vunpack.c.0.s8 %v377
    %v379 = vperm.slane %v371, %v378
    %v380 = vrot.slane %v351, 4
    %v381 = vsel %vm196, %v380, %v339
    %v382 = vrot.slane %v339, 4
    %v383 = vsel %vm196, %v351, %v382
    %v385 = vunpack.c.l.s4 1934713408
    %v386 = vunpack.c.0.s8 %v385
    %v387 = vperm.slane %v381, %v386
    %v389 = vunpack.c.l.s4 1934713408
    %v390 = vunpack.c.0.s8 %v389
    %v391 = vperm.slane %v383, %v390
    %v392 = vrot.slane %v355, 4
    %v393 = vsel %vm196, %v392, %v343
    %v394 = vrot.slane %v343, 4
    %v395 = vsel %vm196, %v355, %v394
    %v397 = vunpack.c.l.s4 1934713408
    %v398 = vunpack.c.0.s8 %v397
    %v399 = vperm.slane %v393, %v398
    %v401 = vunpack.c.l.s4 1934713408
    %v402 = vunpack.c.0.s8 %v401
    %v403 = vperm.slane %v395, %v402
    %v404 = vrot.slane %v387, 4
    %v405 = vsel %vm196, %v404, %v363
    %v406 = vrot.slane %v363, 4
    %v407 = vsel %vm196, %v387, %v406
    %v408 = vrot.slane %v391, 4
    %v409 = vsel %vm196, %v408, %v367
    %v410 = vrot.slane %v367, 4
    %v411 = vsel %vm196, %v391, %v410
    %v412 = vrot.slane %v399, 4
    %v413 = vsel %vm196, %v412, %v375
    %v414 = vrot.slane %v375, 4
    %v415 = vsel %vm196, %v399, %v414
    %v416 = vrot.slane %v403, 4
    %v417 = vsel %vm196, %v416, %v379
    %v418 = vrot.slane %v379, 4
    %v419 = vsel %vm196, %v403, %v418
    %v420 = vrot.slane %v297, 4
    %v421 = vsel %vm196, %v420, %v293
    %v422 = vrot.slane %v293, 4
    %v423 = vsel %vm196, %v297, %v422
    %v425 = vunpack.c.l.s4 1983009808
    %v426 = vunpack.c.0.s8 %v425
    %v427 = vperm.slane %v421, %v426
    %v429 = vunpack.c.l.s4 1983009808
    %v430 = vunpack.c.0.s8 %v429
    %v431 = vperm.slane %v423, %v430
    %v432 = vrot.slane %v299, 4
    %v433 = vsel %vm196, %v432, %v295
    %v434 = vrot.slane %v295, 4
    %v435 = vsel %vm196, %v299, %v434
    %v437 = vunpack.c.l.s4 1983009808
    %v438 = vunpack.c.0.s8 %v437
    %v439 = vperm.slane %v433, %v438
    %v441 = vunpack.c.l.s4 1983009808
    %v442 = vunpack.c.0.s8 %v441
    %v443 = vperm.slane %v435, %v442
    %v444 = vrot.slane %v305, 4
    %v445 = vsel %vm196, %v444, %v301
    %v446 = vrot.slane %v301, 4
    %v447 = vsel %vm196, %v305, %v446
    %v449 = vunpack.c.l.s4 1983009808
    %v450 = vunpack.c.0.s8 %v449
    %v451 = vperm.slane %v445, %v450
    %v453 = vunpack.c.l.s4 1983009808
    %v454 = vunpack.c.0.s8 %v453
    %v455 = vperm.slane %v447, %v454
    %v456 = vrot.slane %v307, 4
    %v457 = vsel %vm196, %v456, %v303
    %v458 = vrot.slane %v303, 4
    %v459 = vsel %vm196, %v307, %v458
    %v461 = vunpack.c.l.s4 1983009808
    %v462 = vunpack.c.0.s8 %v461
    %v463 = vperm.slane %v457, %v462
    %v465 = vunpack.c.l.s4 1983009808
    %v466 = vunpack.c.0.s8 %v465
    %v467 = vperm.slane %v459, %v466
    %v468 = vrot.slane %v439, 4
    %v469 = vsel %vm196, %v468, %v427
    %v470 = vrot.slane %v427, 4
    %v471 = vsel %vm196, %v439, %v470
    %v473 = vunpack.c.l.s4 1934713408
    %v474 = vunpack.c.0.s8 %v473
    %v475 = vperm.slane %v469, %v474
    %v477 = vunpack.c.l.s4 1934713408
    %v478 = vunpack.c.0.s8 %v477
    %v479 = vperm.slane %v471, %v478
    %v480 = vrot.slane %v443, 4
    %v481 = vsel %vm196, %v480, %v431
    %v482 = vrot.slane %v431, 4
    %v483 = vsel %vm196, %v443, %v482
    %v485 = vunpack.c.l.s4 1934713408
    %v486 = vunpack.c.0.s8 %v485
    %v487 = vperm.slane %v481, %v486
    %v489 = vunpack.c.l.s4 1934713408
    %v490 = vunpack.c.0.s8 %v489
    %v491 = vperm.slane %v483, %v490
    %v492 = vrot.slane %v463, 4
    %v493 = vsel %vm196, %v492, %v451
    %v494 = vrot.slane %v451, 4
    %v495 = vsel %vm196, %v463, %v494
    %v497 = vunpack.c.l.s4 1934713408
    %v498 = vunpack.c.0.s8 %v497
    %v499 = vperm.slane %v493, %v498
    %v501 = vunpack.c.l.s4 1934713408
    %v502 = vunpack.c.0.s8 %v501
    %v503 = vperm.slane %v495, %v502
    %v504 = vrot.slane %v467, 4
    %v505 = vsel %vm196, %v504, %v455
    %v506 = vrot.slane %v455, 4
    %v507 = vsel %vm196, %v467, %v506
    %v509 = vunpack.c.l.s4 1934713408
    %v510 = vunpack.c.0.s8 %v509
    %v511 = vperm.slane %v505, %v510
    %v513 = vunpack.c.l.s4 1934713408
    %v514 = vunpack.c.0.s8 %v513
    %v515 = vperm.slane %v507, %v514
    %v516 = vrot.slane %v499, 4
    %v517 = vsel %vm196, %v516, %v475
    %v518 = vrot.slane %v475, 4
    %v519 = vsel %vm196, %v499, %v518
    %v520 = vrot.slane %v503, 4
    %v521 = vsel %vm196, %v520, %v479
    %v522 = vrot.slane %v479, 4
    %v523 = vsel %vm196, %v503, %v522
    %v524 = vrot.slane %v511, 4
    %v525 = vsel %vm196, %v524, %v487
    %v526 = vrot.slane %v487, 4
    %v527 = vsel %vm196, %v511, %v526
    %v528 = vrot.slane %v515, 4
    %v529 = vsel %vm196, %v528, %v491
    %v530 = vrot.slane %v491, 4
    %v531 = vsel %vm196, %v515, %v530
    %v532 = vrot.slane %v409, 4
    %v533 = vsel %vm196, %v532, %v405
    %v534 = vrot.slane %v405, 4
    %v535 = vsel %vm196, %v409, %v534
    %v537 = vunpack.c.l.s4 1983009808
    %v538 = vunpack.c.0.s8 %v537
    %v539 = vperm.slane %v533, %v538
    %v541 = vunpack.c.l.s4 1983009808
    %v542 = vunpack.c.0.s8 %v541
    %v543 = vperm.slane %v535, %v542
    %v544 = vrot.slane %v411, 4
    %v545 = vsel %vm196, %v544, %v407
    %v546 = vrot.slane %v407, 4
    %v547 = vsel %vm196, %v411, %v546
    %v549 = vunpack.c.l.s4 1983009808
    %v550 = vunpack.c.0.s8 %v549
    %v551 = vperm.slane %v545, %v550
    %v553 = vunpack.c.l.s4 1983009808
    %v554 = vunpack.c.0.s8 %v553
    %v555 = vperm.slane %v547, %v554
    %v556 = vrot.slane %v417, 4
    %v557 = vsel %vm196, %v556, %v413
    %v558 = vrot.slane %v413, 4
    %v559 = vsel %vm196, %v417, %v558
    %v561 = vunpack.c.l.s4 1983009808
    %v562 = vunpack.c.0.s8 %v561
    %v563 = vperm.slane %v557, %v562
    %v565 = vunpack.c.l.s4 1983009808
    %v566 = vunpack.c.0.s8 %v565
    %v567 = vperm.slane %v559, %v566
    %v568 = vrot.slane %v419, 4
    %v569 = vsel %vm196, %v568, %v415
    %v570 = vrot.slane %v415, 4
    %v571 = vsel %vm196, %v419, %v570
    %v573 = vunpack.c.l.s4 1983009808
    %v574 = vunpack.c.0.s8 %v573
    %v575 = vperm.slane %v569, %v574
    %v577 = vunpack.c.l.s4 1983009808
    %v578 = vunpack.c.0.s8 %v577
    %v579 = vperm.slane %v571, %v578
    %v580 = vrot.slane %v551, 4
    %v581 = vsel %vm196, %v580, %v539
    %v582 = vrot.slane %v539, 4
    %v583 = vsel %vm196, %v551, %v582
    %v585 = vunpack.c.l.s4 1934713408
    %v586 = vunpack.c.0.s8 %v585
    %v587 = vperm.slane %v581, %v586
    %v589 = vunpack.c.l.s4 1934713408
    %v590 = vunpack.c.0.s8 %v589
    %v591 = vperm.slane %v583, %v590
    %v592 = vrot.slane %v555, 4
    %v593 = vsel %vm196, %v592, %v543
    %v594 = vrot.slane %v543, 4
    %v595 = vsel %vm196, %v555, %v594
    %v597 = vunpack.c.l.s4 1934713408
    %v598 = vunpack.c.0.s8 %v597
    %v599 = vperm.slane %v593, %v598
    %v601 = vunpack.c.l.s4 1934713408
    %v602 = vunpack.c.0.s8 %v601
    %v603 = vperm.slane %v595, %v602
    %v604 = vrot.slane %v575, 4
    %v605 = vsel %vm196, %v604, %v563
    %v606 = vrot.slane %v563, 4
    %v607 = vsel %vm196, %v575, %v606
    %v609 = vunpack.c.l.s4 1934713408
    %v610 = vunpack.c.0.s8 %v609
    %v611 = vperm.slane %v605, %v610
    %v613 = vunpack.c.l.s4 1934713408
    %v614 = vunpack.c.0.s8 %v613
    %v615 = vperm.slane %v607, %v614
    %v616 = vrot.slane %v579, 4
    %v617 = vsel %vm196, %v616, %v567
    %v618 = vrot.slane %v567, 4
    %v619 = vsel %vm196, %v579, %v618
    %v621 = vunpack.c.l.s4 1934713408
    %v622 = vunpack.c.0.s8 %v621
    %v623 = vperm.slane %v617, %v622
    %v625 = vunpack.c.l.s4 1934713408
    %v626 = vunpack.c.0.s8 %v625
    %v627 = vperm.slane %v619, %v626
    %v628 = vrot.slane %v611, 4
    %v629 = vsel %vm196, %v628, %v587
    %v630 = vrot.slane %v587, 4
    %v631 = vsel %vm196, %v611, %v630
    %v632 = vrot.slane %v615, 4
    %v633 = vsel %vm196, %v632, %v591
    %v634 = vrot.slane %v591, 4
    %v635 = vsel %vm196, %v615, %v634
    %v636 = vrot.slane %v623, 4
    %v637 = vsel %vm196, %v636, %v599
    %v638 = vrot.slane %v599, 4
    %v639 = vsel %vm196, %v623, %v638
    %v640 = vrot.slane %v627, 4
    %v641 = vsel %vm196, %v640, %v603
    %v642 = vrot.slane %v603, 4
    %v643 = vsel %vm196, %v627, %v642
    %646 = vrot.lane.b32.xlu0 %v519, 13
    %v647 = vpop.permute.xlu0 %646
    %648 = vrot.lane.b32.xlu0 %v631, 13
    %v649 = vpop.permute.xlu0 %648
    %654 = vrot.lane.b32.xlu0 %v521, 26
    %v655 = vpop.permute.xlu0 %654
    %656 = vrot.lane.b32.xlu0 %v633, 26
    %v657 = vpop.permute.xlu0 %656
    %662 = vrot.lane.b32.xlu0 %v523, 39
    %v663 = vpop.permute.xlu0 %662
    %664 = vrot.lane.b32.xlu0 %v635, 39
    %v665 = vpop.permute.xlu0 %664
    %670 = vrot.lane.b32.xlu0 %v525, 52
    %v671 = vpop.permute.xlu0 %670
    %672 = vrot.lane.b32.xlu0 %v637, 52
    %v673 = vpop.permute.xlu0 %672
    %678 = vrot.lane.b32.xlu0 %v527, 65
    %v679 = vpop.permute.xlu0 %678
    %680 = vrot.lane.b32.xlu0 %v639, 65
    %v681 = vpop.permute.xlu0 %680
    %686 = vrot.lane.b32.xlu0 %v529, 78
    %v687 = vpop.permute.xlu0 %686
    %688 = vrot.lane.b32.xlu0 %v641, 78
    %v689 = vpop.permute.xlu0 %688
    %694 = vrot.lane.b32.xlu0 %v531, 91
    %v695 = vpop.permute.xlu0 %694
    %696 = vrot.lane.b32.xlu0 %v643, 91
    %v697 = vpop.permute.xlu0 %696
    %vm700 = vcmask 105472
    %v701 = vsel %vm700, %v517, %v647
    %v702 = vsel %vm700, %v629, %v649
    %vm703 = vcmask 211968
    %v704 = vsel %vm703, %v701, %v655
    %v705 = vsel %vm703, %v702, %v657
    %vm706 = vcmask 318464
    %v707 = vsel %vm706, %v704, %v663
    %v708 = vsel %vm706, %v705, %v665
    %vm709 = vcmask 424960
    %v710 = vsel %vm709, %v707, %v671
    %v711 = vsel %vm709, %v708, %v673
    %vm712 = vcmask 531456
    %v713 = vsel %vm712, %v710, %v679
    %v714 = vsel %vm712, %v711, %v681
    %vm715 = vcmask 637952
    %v716 = vsel %vm715, %v713, %v687
    %v717 = vsel %vm715, %v714, %v689
    %vm718 = vcmask 744448
    %v719 = vsel %vm718, %v716, %v695
    %v720 = vsel %vm718, %v717, %v697
    %v721 = vsel %vm196, 0.0, 0.0
    %v722 = vsel %vm196, 0.0, 0.0
    %v724 = vunpack.c.l.s4 1983009808
    %v725 = vunpack.c.0.s8 %v724
    %v726 = vperm.slane %v721, %v725
    %v728 = vunpack.c.l.s4 1983009808
    %v729 = vunpack.c.0.s8 %v728
    %v730 = vperm.slane %v722, %v729
    %v731 = vrot.slane %v726, 4
    %v732 = vsel %vm196, %v731, %v726
    %v733 = vsel %vm196, %v726, %v731
    %v735 = vunpack.c.l.s4 1934713408
    %v736 = vunpack.c.0.s8 %v735
    %v737 = vperm.slane %v732, %v736
    %v739 = vunpack.c.l.s4 1934713408
    %v740 = vunpack.c.0.s8 %v739
    %v741 = vperm.slane %v733, %v740
    %v742 = vrot.slane %v730, 4
    %v743 = vsel %vm196, %v742, %v730
    %v744 = vsel %vm196, %v730, %v742
    %v746 = vunpack.c.l.s4 1934713408
    %v747 = vunpack.c.0.s8 %v746
    %v748 = vperm.slane %v743, %v747
    %v750 = vunpack.c.l.s4 1934713408
    %v751 = vunpack.c.0.s8 %v750
    %v752 = vperm.slane %v744, %v751
    %v753 = vrot.slane %v737, 4
    %v754 = vsel %vm196, %v753, %v737
    %v755 = vsel %vm196, %v737, %v753
    %v756 = vrot.slane %v741, 4
    %v757 = vsel %vm196, %v756, %v741
    %v758 = vsel %vm196, %v741, %v756
    %v759 = vrot.slane %v748, 4
    %v760 = vsel %vm196, %v759, %v748
    %v761 = vsel %vm196, %v748, %v759
    %v762 = vrot.slane %v752, 4
    %v763 = vsel %vm196, %v762, %v752
    %v764 = vsel %vm196, %v752, %v762
    %v766 = vunpack.c.l.s4 1983009808
    %v767 = vunpack.c.0.s8 %v766
    %v768 = vperm.slane 0.0, %v767
    %v769 = vrot.slane %v768, 4
    %v770 = vsel %vm196, 0.0, %v769
    %v772 = vunpack.c.l.s4 1934713408
    %v773 = vunpack.c.0.s8 %v772
    %v774 = vperm.slane %v768, %v773
    %v776 = vunpack.c.l.s4 1934713408
    %v777 = vunpack.c.0.s8 %v776
    %v778 = vperm.slane %v770, %v777
    %v779 = vsel %vm196, 0.0, %v742
    %v781 = vunpack.c.l.s4 1934713408
    %v782 = vunpack.c.0.s8 %v781
    %v783 = vperm.slane %v730, %v782
    %v785 = vunpack.c.l.s4 1934713408
    %v786 = vunpack.c.0.s8 %v785
    %v787 = vperm.slane %v779, %v786
    %v788 = vrot.slane %v774, 4
    %v789 = vsel %vm196, %v788, %v737
    %v790 = vsel %vm196, %v774, %v753
    %v791 = vrot.slane %v778, 4
    %v792 = vsel %vm196, %v791, %v741
    %v793 = vsel %vm196, %v778, %v756
    %v794 = vrot.slane %v783, 4
    %v795 = vsel %vm196, %v794, %v748
    %v796 = vsel %vm196, %v783, %v759
    %v797 = vrot.slane %v787, 4
    %v798 = vsel %vm196, %v797, %v752
    %v799 = vsel %vm196, %v787, %v762
    %802 = vrot.lane.b32.xlu0 %v755, 13
    %v803 = vpop.permute.xlu0 %802
    %804 = vrot.lane.b32.xlu0 %v790, 13
    %v805 = vpop.permute.xlu0 %804
    %810 = vrot.lane.b32.xlu0 %v757, 26
    %v811 = vpop.permute.xlu0 %810
    %812 = vrot.lane.b32.xlu0 %v792, 26
    %v813 = vpop.permute.xlu0 %812
    %818 = vrot.lane.b32.xlu0 %v758, 39
    %v819 = vpop.permute.xlu0 %818
    %820 = vrot.lane.b32.xlu0 %v793, 39
    %v821 = vpop.permute.xlu0 %820
    %826 = vrot.lane.b32.xlu0 %v760, 52
    %v827 = vpop.permute.xlu0 %826
    %828 = vrot.lane.b32.xlu0 %v795, 52
    %v829 = vpop.permute.xlu0 %828
    %834 = vrot.lane.b32.xlu0 %v761, 65
    %v835 = vpop.permute.xlu0 %834
    %836 = vrot.lane.b32.xlu0 %v796, 65
    %v837 = vpop.permute.xlu0 %836
    %842 = vrot.lane.b32.xlu0 %v763, 78
    %v843 = vpop.permute.xlu0 %842
    %844 = vrot.lane.b32.xlu0 %v798, 78
    %v845 = vpop.permute.xlu0 %844
    %850 = vrot.lane.b32.xlu0 %v764, 91
    %v851 = vpop.permute.xlu0 %850
    %852 = vrot.lane.b32.xlu0 %v799, 91
    %v853 = vpop.permute.xlu0 %852
    %v856 = vsel %vm700, %v754, %v803
    %v857 = vsel %vm700, %v789, %v805
    %v858 = vsel %vm703, %v856, %v811
    %v859 = vsel %vm703, %v857, %v813
    %v860 = vsel %vm706, %v858, %v819
    %v861 = vsel %vm706, %v859, %v821
    %v862 = vsel %vm709, %v860, %v827
    %v863 = vsel %vm709, %v861, %v829
    %v864 = vsel %vm712, %v862, %v835
    %v865 = vsel %vm712, %v863, %v837
    %v866 = vsel %vm715, %v864, %v843
    %v867 = vsel %vm715, %v865, %v845
    %v868 = vsel %vm718, %v866, %v851
    %v869 = vsel %vm718, %v867, %v853
    %v871 = vsel %vm79, %v193, 0
    %v874 = vsel %vm79, %v194, 0
    %876 = vmatpush.msra.mxu0 0.0
    %877 = vmatpush.msra.mxu0 0.0
    %878 = vmatpush.msra.mxu0 0.0
    %879 = vmatpush.msra.mxu0 0.0
    %880 = vmatpush.msra.mxu0 0.0
    %881 = vmatpush.msra.mxu0 0.0
    %882 = vmatpush.msra.mxu0 0.0
    %883 = vmatpush.msra.mxu0 0.0
    %884 = vmatpush.msra.mxu0 0.0
    %885 = vmatpush.msra.mxu0 0.0
    %886 = vmatpush.msra.mxu0 0.0
    %887 = vmatpush.msra.mxu0 0.0
    %888 = vmatpush.msra.mxu0 0.0
    %889 = vmatpush.msra.mxu0 0.0
    %890 = vmatpush.msra.mxu0 %v720
    %891 = vmatpush.msra.mxu0 %v719
    %892 = vmatmul.f32.gmra.mxu0 %v871
    %v893 = vpop.f32.mrf.mxu0
    %v894 = vadd.f32 %v868, %v893
    %895 = vmatmul.f32.gmra.mxu0 %v874
    %v896 = vpop.f32.mrf.mxu0
    %v897 = vadd.f32 %v869, %v896
    %898 = vdwg.mxu0
    %901 = vrot.lane.b32.xlu0 %v894, 115
    %v902 = vpop.permute.xlu0 %901
    %903 = vrot.lane.b32.xlu0 %v897, 115
    %v904 = vpop.permute.xlu0 %903
    %907 = vrot.lane.b32.xlu0 %v894, 102
    %v908 = vpop.permute.xlu0 %907
    %909 = vrot.lane.b32.xlu0 %v897, 102
    %v910 = vpop.permute.xlu0 %909
    %913 = vrot.lane.b32.xlu0 %v894, 89
    %v914 = vpop.permute.xlu0 %913
    %915 = vrot.lane.b32.xlu0 %v897, 89
    %v916 = vpop.permute.xlu0 %915
    %919 = vrot.lane.b32.xlu0 %v894, 76
    %v920 = vpop.permute.xlu0 %919
    %921 = vrot.lane.b32.xlu0 %v897, 76
    %v922 = vpop.permute.xlu0 %921
    %925 = vrot.lane.b32.xlu0 %v894, 63
    %v926 = vpop.permute.xlu0 %925
    %927 = vrot.lane.b32.xlu0 %v897, 63
    %v928 = vpop.permute.xlu0 %927
    %931 = vrot.lane.b32.xlu0 %v894, 50
    %v932 = vpop.permute.xlu0 %931
    %933 = vrot.lane.b32.xlu0 %v897, 50
    %v934 = vpop.permute.xlu0 %933
    %937 = vrot.lane.b32.xlu0 %v894, 37
    %v938 = vpop.permute.xlu0 %937
    %939 = vrot.lane.b32.xlu0 %v897, 37
    %v940 = vpop.permute.xlu0 %939
    %v943 = vrot.slane %v908, 4
    %v944 = vsel %vm196, %v943, %v894
    %v945 = vrot.slane %v894, 4
    %v946 = vsel %vm196, %v908, %v945
    %v948 = vunpack.c.l.s4 1983009808
    %v949 = vunpack.c.0.s8 %v948
    %v950 = vperm.slane %v944, %v949
    %v952 = vunpack.c.l.s4 1983009808
    %v953 = vunpack.c.0.s8 %v952
    %v954 = vperm.slane %v946, %v953
    %v955 = vrot.slane %v914, 4
    %v956 = vsel %vm196, %v955, %v902
    %v957 = vrot.slane %v902, 4
    %v958 = vsel %vm196, %v914, %v957
    %v960 = vunpack.c.l.s4 1983009808
    %v961 = vunpack.c.0.s8 %v960
    %v962 = vperm.slane %v956, %v961
    %v964 = vunpack.c.l.s4 1983009808
    %v965 = vunpack.c.0.s8 %v964
    %v966 = vperm.slane %v958, %v965
    %v967 = vrot.slane %v932, 4
    %v968 = vsel %vm196, %v967, %v920
    %v969 = vrot.slane %v920, 4
    %v970 = vsel %vm196, %v932, %v969
    %v972 = vunpack.c.l.s4 1983009808
    %v973 = vunpack.c.0.s8 %v972
    %v974 = vperm.slane %v968, %v973
    %v976 = vunpack.c.l.s4 1983009808
    %v977 = vunpack.c.0.s8 %v976
    %v978 = vperm.slane %v970, %v977
    %v979 = vrot.slane %v938, 4
    %v980 = vsel %vm196, %v979, %v926
    %v981 = vrot.slane %v926, 4
    %v982 = vsel %vm196, %v938, %v981
    %v984 = vunpack.c.l.s4 1983009808
    %v985 = vunpack.c.0.s8 %v984
    %v986 = vperm.slane %v980, %v985
    %v988 = vunpack.c.l.s4 1983009808
    %v989 = vunpack.c.0.s8 %v988
    %v990 = vperm.slane %v982, %v989
    %v991 = vrot.slane %v962, 4
    %v992 = vsel %vm196, %v991, %v950
    %v993 = vrot.slane %v950, 4
    %v994 = vsel %vm196, %v962, %v993
    %v996 = vunpack.c.l.s4 1934713408
    %v997 = vunpack.c.0.s8 %v996
    %v998 = vperm.slane %v992, %v997
    %v1000 = vunpack.c.l.s4 1934713408
    %v1001 = vunpack.c.0.s8 %v1000
    %v1002 = vperm.slane %v994, %v1001
    %v1003 = vrot.slane %v966, 4
    %v1004 = vsel %vm196, %v1003, %v954
    %v1005 = vrot.slane %v954, 4
    %v1006 = vsel %vm196, %v966, %v1005
    %v1008 = vunpack.c.l.s4 1934713408
    %v1009 = vunpack.c.0.s8 %v1008
    %v1010 = vperm.slane %v1004, %v1009
    %v1012 = vunpack.c.l.s4 1934713408
    %v1013 = vunpack.c.0.s8 %v1012
    %v1014 = vperm.slane %v1006, %v1013
    %v1015 = vrot.slane %v986, 4
    %v1016 = vsel %vm196, %v1015, %v974
    %v1017 = vrot.slane %v974, 4
    %v1018 = vsel %vm196, %v986, %v1017
    %v1020 = vunpack.c.l.s4 1934713408
    %v1021 = vunpack.c.0.s8 %v1020
    %v1022 = vperm.slane %v1016, %v1021
    %v1024 = vunpack.c.l.s4 1934713408
    %v1025 = vunpack.c.0.s8 %v1024
    %v1026 = vperm.slane %v1018, %v1025
    %v1027 = vrot.slane %v990, 4
    %v1028 = vsel %vm196, %v1027, %v978
    %v1029 = vrot.slane %v978, 4
    %v1030 = vsel %vm196, %v990, %v1029
    %v1032 = vunpack.c.l.s4 1934713408
    %v1033 = vunpack.c.0.s8 %v1032
    %v1034 = vperm.slane %v1028, %v1033
    %v1036 = vunpack.c.l.s4 1934713408
    %v1037 = vunpack.c.0.s8 %v1036
    %v1038 = vperm.slane %v1030, %v1037
    %v1039 = vrot.slane %v1022, 4
    %v1040 = vsel %vm196, %v1039, %v998
    %v1041 = vrot.slane %v998, 4
    %v1042 = vsel %vm196, %v1022, %v1041
    %v1043 = vrot.slane %v1026, 4
    %v1044 = vsel %vm196, %v1043, %v1002
    %v1045 = vrot.slane %v1002, 4
    %v1046 = vsel %vm196, %v1026, %v1045
    %v1047 = vrot.slane %v1034, 4
    %v1048 = vsel %vm196, %v1047, %v1010
    %v1049 = vrot.slane %v1010, 4
    %v1050 = vsel %vm196, %v1034, %v1049
    %v1051 = vrot.slane %v1038, 4
    %v1052 = vsel %vm196, %v1051, %v1014
    %v1053 = vrot.slane %v1014, 4
    %v1054 = vsel %vm196, %v1038, %v1053
    %v1055 = vrot.slane %v910, 4
    %v1056 = vsel %vm196, %v1055, %v897
    %v1057 = vrot.slane %v897, 4
    %v1058 = vsel %vm196, %v910, %v1057
    %v1060 = vunpack.c.l.s4 1983009808
    %v1061 = vunpack.c.0.s8 %v1060
    %v1062 = vperm.slane %v1056, %v1061
    %v1064 = vunpack.c.l.s4 1983009808
    %v1065 = vunpack.c.0.s8 %v1064
    %v1066 = vperm.slane %v1058, %v1065
    %v1067 = vrot.slane %v916, 4
    %v1068 = vsel %vm196, %v1067, %v904
    %v1069 = vrot.slane %v904, 4
    %v1070 = vsel %vm196, %v916, %v1069
    %v1072 = vunpack.c.l.s4 1983009808
    %v1073 = vunpack.c.0.s8 %v1072
    %v1074 = vperm.slane %v1068, %v1073
    %v1076 = vunpack.c.l.s4 1983009808
    %v1077 = vunpack.c.0.s8 %v1076
    %v1078 = vperm.slane %v1070, %v1077
    %v1079 = vrot.slane %v934, 4
    %v1080 = vsel %vm196, %v1079, %v922
    %v1081 = vrot.slane %v922, 4
    %v1082 = vsel %vm196, %v934, %v1081
    %v1084 = vunpack.c.l.s4 1983009808
    %v1085 = vunpack.c.0.s8 %v1084
    %v1086 = vperm.slane %v1080, %v1085
    %v1088 = vunpack.c.l.s4 1983009808
    %v1089 = vunpack.c.0.s8 %v1088
    %v1090 = vperm.slane %v1082, %v1089
    %v1091 = vrot.slane %v940, 4
    %v1092 = vsel %vm196, %v1091, %v928
    %v1093 = vrot.slane %v928, 4
    %v1094 = vsel %vm196, %v940, %v1093
    %v1096 = vunpack.c.l.s4 1983009808
    %v1097 = vunpack.c.0.s8 %v1096
    %v1098 = vperm.slane %v1092, %v1097
    %v1100 = vunpack.c.l.s4 1983009808
    %v1101 = vunpack.c.0.s8 %v1100
    %v1102 = vperm.slane %v1094, %v1101
    %v1103 = vrot.slane %v1074, 4
    %v1104 = vsel %vm196, %v1103, %v1062
    %v1105 = vrot.slane %v1062, 4
    %v1106 = vsel %vm196, %v1074, %v1105
    %v1108 = vunpack.c.l.s4 1934713408
    %v1109 = vunpack.c.0.s8 %v1108
    %v1110 = vperm.slane %v1104, %v1109
    %v1112 = vunpack.c.l.s4 1934713408
    %v1113 = vunpack.c.0.s8 %v1112
    %v1114 = vperm.slane %v1106, %v1113
    %v1115 = vrot.slane %v1078, 4
    %v1116 = vsel %vm196, %v1115, %v1066
    %v1118 = vunpack.c.l.s4 1934713408
    %v1119 = vunpack.c.0.s8 %v1118
    %v1120 = vperm.slane %v1116, %v1119
    %v1121 = vrot.slane %v1098, 4
    %v1122 = vsel %vm196, %v1121, %v1086
    %v1123 = vrot.slane %v1086, 4
    %v1124 = vsel %vm196, %v1098, %v1123
    %v1126 = vunpack.c.l.s4 1934713408
    %v1127 = vunpack.c.0.s8 %v1126
    %v1128 = vperm.slane %v1122, %v1127
    %v1130 = vunpack.c.l.s4 1934713408
    %v1131 = vunpack.c.0.s8 %v1130
    %v1132 = vperm.slane %v1124, %v1131
    %v1133 = vrot.slane %v1102, 4
    %v1134 = vsel %vm196, %v1133, %v1090
    %v1136 = vunpack.c.l.s4 1934713408
    %v1137 = vunpack.c.0.s8 %v1136
    %v1138 = vperm.slane %v1134, %v1137
    %v1139 = vrot.slane %v1128, 4
    %v1140 = vsel %vm196, %v1139, %v1110
    %v1141 = vrot.slane %v1110, 4
    %v1142 = vsel %vm196, %v1128, %v1141
    %v1143 = vrot.slane %v1132, 4
    %v1144 = vsel %vm196, %v1143, %v1114
    %v1145 = vrot.slane %v1114, 4
    %v1146 = vsel %vm196, %v1132, %v1145
    %v1147 = vrot.slane %v1138, 4
    %v1148 = vsel %vm196, %v1147, %v1120
    %v1149 = vrot.slane %v1044, 4
    %v1150 = vsel %vm196, %v1149, %v1040
    %v1151 = vrot.slane %v1040, 4
    %v1152 = vsel %vm196, %v1044, %v1151
    %v1154 = vunpack.c.l.s4 1983009808
    %v1155 = vunpack.c.0.s8 %v1154
    %v1156 = vperm.slane %v1150, %v1155
    %v1158 = vunpack.c.l.s4 1983009808
    %v1159 = vunpack.c.0.s8 %v1158
    %v1160 = vperm.slane %v1152, %v1159
    %v1161 = vrot.slane %v1046, 4
    %v1162 = vsel %vm196, %v1161, %v1042
    %v1163 = vrot.slane %v1042, 4
    %v1164 = vsel %vm196, %v1046, %v1163
    %v1166 = vunpack.c.l.s4 1983009808
    %v1167 = vunpack.c.0.s8 %v1166
    %v1168 = vperm.slane %v1162, %v1167
    %v1170 = vunpack.c.l.s4 1983009808
    %v1171 = vunpack.c.0.s8 %v1170
    %v1172 = vperm.slane %v1164, %v1171
    %v1173 = vrot.slane %v1052, 4
    %v1174 = vsel %vm196, %v1173, %v1048
    %v1175 = vrot.slane %v1048, 4
    %v1176 = vsel %vm196, %v1052, %v1175
    %v1178 = vunpack.c.l.s4 1983009808
    %v1179 = vunpack.c.0.s8 %v1178
    %v1180 = vperm.slane %v1174, %v1179
    %v1182 = vunpack.c.l.s4 1983009808
    %v1183 = vunpack.c.0.s8 %v1182
    %v1184 = vperm.slane %v1176, %v1183
    %v1185 = vrot.slane %v1054, 4
    %v1186 = vsel %vm196, %v1185, %v1050
    %v1187 = vrot.slane %v1050, 4
    %v1188 = vsel %vm196, %v1054, %v1187
    %v1190 = vunpack.c.l.s4 1983009808
    %v1191 = vunpack.c.0.s8 %v1190
    %v1192 = vperm.slane %v1186, %v1191
    %v1194 = vunpack.c.l.s4 1983009808
    %v1195 = vunpack.c.0.s8 %v1194
    %v1196 = vperm.slane %v1188, %v1195
    %v1197 = vrot.slane %v1168, 4
    %v1198 = vsel %vm196, %v1197, %v1156
    %v1199 = vrot.slane %v1156, 4
    %v1200 = vsel %vm196, %v1168, %v1199
    %v1202 = vunpack.c.l.s4 1934713408
    %v1203 = vunpack.c.0.s8 %v1202
    %v1204 = vperm.slane %v1198, %v1203
    %v1206 = vunpack.c.l.s4 1934713408
    %v1207 = vunpack.c.0.s8 %v1206
    %v1208 = vperm.slane %v1200, %v1207
    %v1209 = vrot.slane %v1172, 4
    %v1210 = vsel %vm196, %v1209, %v1160
    %v1211 = vrot.slane %v1160, 4
    %v1212 = vsel %vm196, %v1172, %v1211
    %v1214 = vunpack.c.l.s4 1934713408
    %v1215 = vunpack.c.0.s8 %v1214
    %v1216 = vperm.slane %v1210, %v1215
    %v1218 = vunpack.c.l.s4 1934713408
    %v1219 = vunpack.c.0.s8 %v1218
    %v1220 = vperm.slane %v1212, %v1219
    %v1221 = vrot.slane %v1192, 4
    %v1222 = vsel %vm196, %v1221, %v1180
    %v1223 = vrot.slane %v1180, 4
    %v1224 = vsel %vm196, %v1192, %v1223
    %v1226 = vunpack.c.l.s4 1934713408
    %v1227 = vunpack.c.0.s8 %v1226
    %v1228 = vperm.slane %v1222, %v1227
    %v1230 = vunpack.c.l.s4 1934713408
    %v1231 = vunpack.c.0.s8 %v1230
    %v1232 = vperm.slane %v1224, %v1231
    %v1233 = vrot.slane %v1196, 4
    %v1234 = vsel %vm196, %v1233, %v1184
    %v1235 = vrot.slane %v1184, 4
    %v1236 = vsel %vm196, %v1196, %v1235
    %v1238 = vunpack.c.l.s4 1934713408
    %v1239 = vunpack.c.0.s8 %v1238
    %v1240 = vperm.slane %v1234, %v1239
    %v1242 = vunpack.c.l.s4 1934713408
    %v1243 = vunpack.c.0.s8 %v1242
    %v1244 = vperm.slane %v1236, %v1243
    %v1245 = vrot.slane %v1228, 4
    %v1246 = vsel %vm196, %v1245, %v1204
    %v1247 = vrot.slane %v1204, 4
    %v1248 = vsel %vm196, %v1228, %v1247
    %v1249 = vrot.slane %v1232, 4
    %v1250 = vsel %vm196, %v1249, %v1208
    %v1251 = vrot.slane %v1208, 4
    %v1252 = vsel %vm196, %v1232, %v1251
    %v1253 = vrot.slane %v1240, 4
    %v1254 = vsel %vm196, %v1253, %v1216
    %v1255 = vrot.slane %v1216, 4
    %v1256 = vsel %vm196, %v1240, %v1255
    %v1257 = vrot.slane %v1244, 4
    %v1258 = vsel %vm196, %v1257, %v1220
    %v1259 = vrot.slane %v1220, 4
    %v1260 = vsel %vm196, %v1244, %v1259
    %v1261 = vrot.slane %v1144, 4
    %v1262 = vsel %vm196, %v1261, %v1140
    %v1263 = vrot.slane %v1140, 4
    %v1264 = vsel %vm196, %v1144, %v1263
    %v1266 = vunpack.c.l.s4 1983009808
    %v1267 = vunpack.c.0.s8 %v1266
    %v1268 = vperm.slane %v1262, %v1267
    %v1270 = vunpack.c.l.s4 1983009808
    %v1271 = vunpack.c.0.s8 %v1270
    %v1272 = vperm.slane %v1264, %v1271
    %v1273 = vrot.slane %v1146, 4
    %v1274 = vsel %vm196, %v1273, %v1142
    %v1275 = vrot.slane %v1142, 4
    %v1276 = vsel %vm196, %v1146, %v1275
    %v1278 = vunpack.c.l.s4 1983009808
    %v1279 = vunpack.c.0.s8 %v1278
    %v1280 = vperm.slane %v1274, %v1279
    %v1282 = vunpack.c.l.s4 1983009808
    %v1283 = vunpack.c.0.s8 %v1282
    %v1284 = vperm.slane %v1276, %v1283
    %v1285 = vrot.slane %v1148, 4
    %v1286 = vsel %vm196, 0.0, %v1285
    %v1288 = vunpack.c.l.s4 1983009808
    %v1289 = vunpack.c.0.s8 %v1288
    %v1290 = vperm.slane %v1148, %v1289
    %v1292 = vunpack.c.l.s4 1983009808
    %v1293 = vunpack.c.0.s8 %v1292
    %v1294 = vperm.slane %v1286, %v1293
    %v1295 = vrot.slane %v1280, 4
    %v1296 = vsel %vm196, %v1295, %v1268
    %v1297 = vrot.slane %v1268, 4
    %v1298 = vsel %vm196, %v1280, %v1297
    %v1300 = vunpack.c.l.s4 1934713408
    %v1301 = vunpack.c.0.s8 %v1300
    %v1302 = vperm.slane %v1296, %v1301
    %v1304 = vunpack.c.l.s4 1934713408
    %v1305 = vunpack.c.0.s8 %v1304
    %v1306 = vperm.slane %v1298, %v1305
    %v1307 = vrot.slane %v1284, 4
    %v1308 = vsel %vm196, %v1307, %v1272
    %v1309 = vrot.slane %v1272, 4
    %v1310 = vsel %vm196, %v1284, %v1309
    %v1312 = vunpack.c.l.s4 1934713408
    %v1313 = vunpack.c.0.s8 %v1312
    %v1314 = vperm.slane %v1308, %v1313
    %v1316 = vunpack.c.l.s4 1934713408
    %v1317 = vunpack.c.0.s8 %v1316
    %v1318 = vperm.slane %v1310, %v1317
    %v1319 = vrot.slane %v1290, 4
    %v1320 = vsel %vm196, 0.0, %v1319
    %v1322 = vunpack.c.l.s4 1934713408
    %v1323 = vunpack.c.0.s8 %v1322
    %v1324 = vperm.slane %v1290, %v1323
    %v1326 = vunpack.c.l.s4 1934713408
    %v1327 = vunpack.c.0.s8 %v1326
    %v1328 = vperm.slane %v1320, %v1327
    %v1329 = vrot.slane %v1294, 4
    %v1330 = vsel %vm196, 0.0, %v1329
    %v1332 = vunpack.c.l.s4 1934713408
    %v1333 = vunpack.c.0.s8 %v1332
    %v1334 = vperm.slane %v1294, %v1333
    %v1336 = vunpack.c.l.s4 1934713408
    %v1337 = vunpack.c.0.s8 %v1336
    %v1338 = vperm.slane %v1330, %v1337
    %v1339 = vrot.slane %v1324, 4
    %v1340 = vsel %vm196, %v1339, %v1302
    %v1341 = vrot.slane %v1302, 4
    %v1342 = vsel %vm196, %v1324, %v1341
    %v1343 = vrot.slane %v1328, 4
    %v1344 = vsel %vm196, %v1343, %v1306
    %v1345 = vrot.slane %v1306, 4
    %v1346 = vsel %vm196, %v1328, %v1345
    %v1347 = vrot.slane %v1334, 4
    %v1348 = vsel %vm196, %v1347, %v1314
    %v1349 = vrot.slane %v1314, 4
    %v1350 = vsel %vm196, %v1334, %v1349
    %v1351 = vrot.slane %v1338, 4
    %v1352 = vsel %vm196, %v1351, %v1318
    %v1353 = vrot.slane %v1318, 4
    %v1354 = vsel %vm196, %v1338, %v1353
    %1355 = vst.msk [vmem:[%s3] sm:$0xff] %vm700, %v1246
    %vm1356 = vcmask 102400
    %1357 = vst.msk [vmem:[%s3 + $0x8] sm:$0x1f] %vm1356, %v1340
    %1358 = vst.msk [vmem:[%s3 + $0x10] sm:$0xff] %vm700, %v1248
    %1359 = vst.msk [vmem:[%s3 + $0x18] sm:$0x1f] %vm1356, %v1342
    %1360 = vst.msk [vmem:[%s3 + $0x20] sm:$0xff] %vm700, %v1250
    %1361 = vst.msk [vmem:[%s3 + $0x28] sm:$0x1f] %vm1356, %v1344
    %1362 = vst.msk [vmem:[%s3 + $0x30] sm:$0xff] %vm700, %v1252
    %1363 = vst.msk [vmem:[%s3 + $0x38] sm:$0x1f] %vm1356, %v1346
    %1364 = vst.msk [vmem:[%s3 + $0x40] sm:$0xff] %vm700, %v1254
    %1365 = vst.msk [vmem:[%s3 + $0x48] sm:$0x1f] %vm1356, %v1348
    %1366 = vst.msk [vmem:[%s3 + $0x50] sm:$0xff] %vm700, %v1256
    %1367 = vst.msk [vmem:[%s3 + $0x58] sm:$0x1f] %vm1356, %v1350
    %1368 = vst.msk [vmem:[%s3 + $0x60] sm:$0xff] %vm700, %v1258
    %1369 = vst.msk [vmem:[%s3 + $0x68] sm:$0x1f] %vm1356, %v1352
    %1370 = vst.msk [vmem:[%s3 + $0x70] sm:$0xff] %vm700, %v1260
    %1371 = vst.msk [vmem:[%s3 + $0x78] sm:$0x1f] %vm1356, %v1354
    // Predicated region
    $region26: #{tpu_custom_call.1} parent=1 // pred_check
      _
    $region27: #{tpu_custom_call.1} parent=1 // pred_check_branch
      %1373 = sbr.rel (0) target = $region29
    $region28: #{tpu_custom_call.1} parent=1 // pred_region
      _
    $region29: #{tpu_custom_call.1} parent=1 // pred_fallthru
      _
    // Predicated region
    $region30: #{tpu_custom_call.1} parent=1 // pred_check
      _
    $region31: #{tpu_custom_call.1} parent=1 // pred_check_branch
      %1375 = sbr.rel (0) target = $region33
    $region32: #{tpu_custom_call.1} parent=1 // pred_region
      _
    $region33: #{tpu_custom_call.1} parent=1 // pred_fallthru
      _
    %1376 = vsyncpa [#allocation3], 1
    %1377 = vsyncpa [#allocation5], 1

// kernel: tpu_custom_call.1
$region0: #{tpu_custom_call.1}
  #allocation0 [shape = 'u32[]', space=smem, size = 0x4, offset = 0x4, fixed_abs, tag = 'smem constant byte address 0x4 - core index']
  #allocation1 [shape = 'u32[72,128]{1,0:T(1,128)}', space=vmem, size = 0x9000, scoped, tag = 'internal scratch']
  #allocation2 [shape = 'f32[128,13]{1,0:T(8,128)}', space=vmem, size = 0x10000, scoped, tag = 'scratch operand']
  %s0 = inlined_call_operand.vmem [shape: f32[13,16], index: 0, kind: input, shape index: {}]
  %s1 = inlined_call_operand.vmem [shape: f32[16,13], index: 1, kind: input, shape index: {}]
  %s2 = inlined_call_operand.vmem [shape: f32[128,16], index: 2, kind: input, shape index: {}]
  %s3 = inlined_call_operand.vmem [shape: f32[104,13], index: 3, kind: output, shape index: {}]
  %s4 = sld [smem:[#allocation0]]
  $region22: #{tpu_custom_call.1} parent=0
    _
  %s6 = ssub.s32 1, %s4
  %s7 = scalar_select 0, %s6, %s4
  // Predicated region
  $region2: #{tpu_custom_call.1} parent=0 // pred_check
    _
  $region3: #{tpu_custom_call.1} parent=0 // pred_check_branch
    %9 = sbr.rel (0) target = $region5
  $region4: #{tpu_custom_call.1} parent=0 // pred_region
    _
  $region5: #{tpu_custom_call.1} parent=0 // pred_fallthru
    _
  // Predicated region
  $region6: #{tpu_custom_call.1} parent=0 // pred_check
    _
  $region7: #{tpu_custom_call.1} parent=0 // pred_check_branch
    %11 = sbr.rel (0) target = $region9
  $region8: #{tpu_custom_call.1} parent=0 // pred_region
    _
  $region9: #{tpu_custom_call.1} parent=0 // pred_fallthru
    _
  // Predicated region
  $region10: #{tpu_custom_call.1} parent=0 // pred_check
    _
  $region11: #{tpu_custom_call.1} parent=0 // pred_check_branch
    %13 = sbr.rel (0) target = $region13
  $region12: #{tpu_custom_call.1} parent=0 // pred_region
    _
  $region13: #{tpu_custom_call.1} parent=0 // pred_fallthru
    _
  %v14 = vld [vmem:[%s2] sm:$0xff]
  %v15 = vld [vmem:[%s2 + $0x8] sm:$0xff]
  %v16 = vld [vmem:[%s2 + $0x10] sm:$0xff]
  %v17 = vld [vmem:[%s2 + $0x18] sm:$0xff]
  %v18 = vld [vmem:[%s2 + $0x20] sm:$0xff]
  %v19 = vld [vmem:[%s2 + $0x28] sm:$0xff]
  %v20 = vld [vmem:[%s2 + $0x30] sm:$0xff]
  %v21 = vld [vmem:[%s2 + $0x38] sm:$0xff]
  %v22 = vld [vmem:[%s2 + $0x40] sm:$0xff]
  %v23 = vld [vmem:[%s2 + $0x48] sm:$0xff]
  %v24 = vld [vmem:[%s2 + $0x50] sm:$0xff]
  %v25 = vld [vmem:[%s2 + $0x58] sm:$0xff]
  %v26 = vld [vmem:[%s2 + $0x60] sm:$0xff]
  %v27 = vld [vmem:[%s2 + $0x68] sm:$0xff]
  %v28 = vld [vmem:[%s2 + $0x70] sm:$0xff]
  %v29 = vld [vmem:[%s2 + $0x78] sm:$0xff]
  %v30 = vld [vmem:[%s1] sm:$0xff]
  %v31 = vld [vmem:[%s1 + $0x8] sm:$0xff]
  %vm32 = vcmask 130048
  %v34 = vsel %vm32, %v14, 0
  %v37 = vsel %vm32, %v15, 0
  %v40 = vsel %vm32, %v16, 0
  %v43 = vsel %vm32, %v17, 0
  %v46 = vsel %vm32, %v18, 0
  %v49 = vsel %vm32, %v19, 0
  %v52 = vsel %vm32, %v20, 0
  %v55 = vsel %vm32, %v21, 0
  %v58 = vsel %vm32, %v22, 0
  %v61 = vsel %vm32, %v23, 0
  %v64 = vsel %vm32, %v24, 0
  %v67 = vsel %vm32, %v25, 0
  %v70 = vsel %vm32, %v26, 0
  %v73 = vsel %vm32, %v27, 0
  %v76 = vsel %vm32, %v28, 0
  %v79 = vsel %vm32, %v29, 0
  %81 = vmatpush.msra.mxu0 0.0
  %82 = vmatpush.msra.mxu0 0.0
  %83 = vmatpush.msra.mxu0 0.0
  %84 = vmatpush.msra.mxu0 0.0
  %85 = vmatpush.msra.mxu0 0.0
  %86 = vmatpush.msra.mxu0 0.0
  %87 = vmatpush.msra.mxu0 0.0
  %88 = vmatpush.msra.mxu0 0.0
  %89 = vmatpush.msra.mxu0 0.0
  %90 = vmatpush.msra.mxu0 0.0
  %91 = vmatpush.msra.mxu0 0.0
  %92 = vmatpush.msra.mxu0 0.0
  %93 = vmatpush.msra.mxu0 0.0
  %94 = vmatpush.msra.mxu0 0.0
  %95 = vmatpush.msra.mxu0 %v31
  %96 = vmatpush.msra.mxu0 %v30
  %97 = vmatmul.f32.gmra.mxu0 %v34
  %v98 = vpop.f32.mrf.mxu0
  %v99 = vadd.f32 0.0, %v98
  %100 = vmatmul.f32.gmra.mxu0 %v37
  %v101 = vpop.f32.mrf.mxu0
  %v102 = vadd.f32 0.0, %v101
  %103 = vmatmul.f32.gmra.mxu0 %v40
  %v104 = vpop.f32.mrf.mxu0
  %v105 = vadd.f32 0.0, %v104
  %106 = vmatmul.f32.gmra.mxu0 %v43
  %v107 = vpop.f32.mrf.mxu0
  %v108 = vadd.f32 0.0, %v107
  %109 = vmatmul.f32.gmra.mxu0 %v46
  %v110 = vpop.f32.mrf.mxu0
  %v111 = vadd.f32 0.0, %v110
  %112 = vmatmul.f32.gmra.mxu0 %v49
  %v113 = vpop.f32.mrf.mxu0
  %v114 = vadd.f32 0.0, %v113
  %115 = vmatmul.f32.gmra.mxu0 %v52
  %v116 = vpop.f32.mrf.mxu0
  %v117 = vadd.f32 0.0, %v116
  %118 = vmatmul.f32.gmra.mxu0 %v55
  %v119 = vpop.f32.mrf.mxu0
  %v120 = vadd.f32 0.0, %v119
  %121 = vmatmul.f32.gmra.mxu0 %v58
  %v122 = vpop.f32.mrf.mxu0
  %v123 = vadd.f32 0.0, %v122
  %124 = vmatmul.f32.gmra.mxu0 %v61
  %v125 = vpop.f32.mrf.mxu0
  %v126 = vadd.f32 0.0, %v125
  %127 = vmatmul.f32.gmra.mxu0 %v64
  %v128 = vpop.f32.mrf.mxu0
  %v129 = vadd.f32 0.0, %v128
  %130 = vmatmul.f32.gmra.mxu0 %v67
  %v131 = vpop.f32.mrf.mxu0
  %v132 = vadd.f32 0.0, %v131
  %133 = vmatmul.f32.gmra.mxu0 %v70
  %v134 = vpop.f32.mrf.mxu0
  %v135 = vadd.f32 0.0, %v134
  %136 = vmatmul.f32.gmra.mxu0 %v73
  %v137 = vpop.f32.mrf.mxu0
  %v138 = vadd.f32 0.0, %v137
  %139 = vmatmul.f32.gmra.mxu0 %v76
  %v140 = vpop.f32.mrf.mxu0
  %v141 = vadd.f32 0.0, %v140
  %142 = vmatmul.f32.gmra.mxu0 %v79
  %v143 = vpop.f32.mrf.mxu0
  %v144 = vadd.f32 0.0, %v143
  %145 = vdwg.mxu0
  %vm146 = vcmask 105472
  %147 = vst.msk [vmem:[#allocation2] sm:$0xff] %vm146, %v99
  %148 = vst.msk [vmem:[#allocation2 + $0x8] sm:$0xff] %vm146, %v102
  %149 = vst.msk [vmem:[#allocation2 + $0x10] sm:$0xff] %vm146, %v105
  %150 = vst.msk [vmem:[#allocation2 + $0x18] sm:$0xff] %vm146, %v108
  %151 = vst.msk [vmem:[#allocation2 + $0x20] sm:$0xff] %vm146, %v111
  %152 = vst.msk [vmem:[#allocation2 + $0x28] sm:$0xff] %vm146, %v114
  %153 = vst.msk [vmem:[#allocation2 + $0x30] sm:$0xff] %vm146, %v117
  %154 = vst.msk [vmem:[#allocation2 + $0x38] sm:$0xff] %vm146, %v120
  %155 = vst.msk [vmem:[#allocation2 + $0x40] sm:$0xff] %vm146, %v123
  %156 = vst.msk [vmem:[#allocation2 + $0x48] sm:$0xff] %vm146, %v126
  %157 = vst.msk [vmem:[#allocation2 + $0x50] sm:$0xff] %vm146, %v129
  %158 = vst.msk [vmem:[#allocation2 + $0x58] sm:$0xff] %vm146, %v132
  %159 = vst.msk [vmem:[#allocation2 + $0x60] sm:$0xff] %vm146, %v135
  %160 = vst.msk [vmem:[#allocation2 + $0x68] sm:$0xff] %vm146, %v138
  %161 = vst.msk [vmem:[#allocation2 + $0x70] sm:$0xff] %vm146, %v141
  %162 = vst.msk [vmem:[#allocation2 + $0x78] sm:$0xff] %vm146, %v144
  %v163 = vld [vmem:[%s0] sm:$0xff]
  %v164 = vld [vmem:[%s0 + $0x8] sm:$0x1f]
  %v165 = vld [vmem:[#allocation2] sm:$0xff]
  %v166 = vld [vmem:[#allocation2 + $0x8] sm:$0xff]
  %v168 = vsel %vm32, %v163, 0
  %v171 = vsel %vm32, %v164, 0
  %173 = vmatpush.msra.mxu0 0.0
  %174 = vmatpush.msra.mxu0 0.0
  %175 = vmatpush.msra.mxu0 0.0
  %176 = vmatpush.msra.mxu0 0.0
  %177 = vmatpush.msra.mxu0 0.0
  %178 = vmatpush.msra.mxu0 0.0
  %179 = vmatpush.msra.mxu0 0.0
  %180 = vmatpush.msra.mxu0 0.0
  %181 = vmatpush.msra.mxu0 0.0
  %182 = vmatpush.msra.mxu0 0.0
  %183 = vmatpush.msra.mxu0 0.0
  %184 = vmatpush.msra.mxu0 0.0
  %185 = vmatpush.msra.mxu0 0.0
  %186 = vmatpush.msra.mxu0 0.0
  %187 = vmatpush.msra.mxu0 %v166
  %188 = vmatpush.msra.mxu0 %v165
  %189 = vmatmul.f32.gmra.mxu0 %v168
  %v190 = vpop.f32.mrf.mxu0
  %v191 = vadd.f32 0.0, %v190
  %192 = vmatmul.f32.gmra.mxu0 %v171
  %v193 = vpop.f32.mrf.mxu0
  %v194 = vadd.f32 0.0, %v193
  %195 = vdwg.mxu0
  %196 = vst.msk [vmem:[%s3] sm:$0xff] %vm146, %v191
  %vm197 = vcmask 102400
  %198 = vst.msk [vmem:[%s3 + $0x8] sm:$0x1f] %vm197, %v194
  %s199 = scalar_lea.vmem [#allocation2], 16
  %v200 = vld [vmem:[%s199] sm:$0xff]
  %v201 = vld [vmem:[%s199 + $0x8] sm:$0xff]
  %202 = vmatpush.msra.mxu0 0.0
  %203 = vmatpush.msra.mxu0 0.0
  %204 = vmatpush.msra.mxu0 0.0
  %205 = vmatpush.msra.mxu0 0.0
  %206 = vmatpush.msra.mxu0 0.0
  %207 = vmatpush.msra.mxu0 0.0
  %208 = vmatpush.msra.mxu0 0.0
  %209 = vmatpush.msra.mxu0 0.0
  %210 = vmatpush.msra.mxu0 0.0
  %211 = vmatpush.msra.mxu0 0.0
  %212 = vmatpush.msra.mxu0 0.0
  %213 = vmatpush.msra.mxu0 0.0
  %214 = vmatpush.msra.mxu0 0.0
  %215 = vmatpush.msra.mxu0 0.0
  %216 = vmatpush.msra.mxu0 %v201
  %217 = vmatpush.msra.mxu0 %v200
  %218 = vmatmul.f32.gmra.mxu0 %v168
  %v219 = vpop.f32.mrf.mxu0
  %v220 = vadd.f32 0.0, %v219
  %221 = vmatmul.f32.gmra.mxu0 %v171
  %v222 = vpop.f32.mrf.mxu0
  %v223 = vadd.f32 0.0, %v222
  %224 = vdwg.mxu0
  %225 = vst.msk [vmem:[%s3 + $0xd] sm:$0xff] %vm146, %v220
  %226 = vst.msk [vmem:[%s3 + $0x15] sm:$0x1f] %vm197, %v223
  %s227 = scalar_lea.vmem [#allocation2], 32
  %v228 = vld [vmem:[%s227] sm:$0xff]
  %v229 = vld [vmem:[%s227 + $0x8] sm:$0xff]
  %230 = vmatpush.msra.mxu0 0.0
  %231 = vmatpush.msra.mxu0 0.0
  %232 = vmatpush.msra.mxu0 0.0
  %233 = vmatpush.msra.mxu0 0.0
  %234 = vmatpush.msra.mxu0 0.0
  %235 = vmatpush.msra.mxu0 0.0
  %236 = vmatpush.msra.mxu0 0.0
  %237 = vmatpush.msra.mxu0 0.0
  %238 = vmatpush.msra.mxu0 0.0
  %239 = vmatpush.msra.mxu0 0.0
  %240 = vmatpush.msra.mxu0 0.0
  %241 = vmatpush.msra.mxu0 0.0
  %242 = vmatpush.msra.mxu0 0.0
  %243 = vmatpush.msra.mxu0 0.0
  %244 = vmatpush.msra.mxu0 %v229
  %245 = vmatpush.msra.mxu0 %v228
  %246 = vmatmul.f32.gmra.mxu0 %v168
  %v247 = vpop.f32.mrf.mxu0
  %v248 = vadd.f32 0.0, %v247
  %249 = vmatmul.f32.gmra.mxu0 %v171
  %v250 = vpop.f32.mrf.mxu0
  %v251 = vadd.f32 0.0, %v250
  %252 = vdwg.mxu0
  %253 = vst.msk [vmem:[%s3 + $0x1a] sm:$0xff] %vm146, %v248
  %254 = vst.msk [vmem:[%s3 + $0x22] sm:$0x1f] %vm197, %v251
  %s255 = scalar_lea.vmem [#allocation2], 48
  %v256 = vld [vmem:[%s255] sm:$0xff]
  %v257 = vld [vmem:[%s255 + $0x8] sm:$0xff]
  %258 = vmatpush.msra.mxu0 0.0
  %259 = vmatpush.msra.mxu0 0.0
  %260 = vmatpush.msra.mxu0 0.0
  %261 = vmatpush.msra.mxu0 0.0
  %262 = vmatpush.msra.mxu0 0.0
  %263 = vmatpush.msra.mxu0 0.0
  %264 = vmatpush.msra.mxu0 0.0
  %265 = vmatpush.msra.mxu0 0.0
  %266 = vmatpush.msra.mxu0 0.0
  %267 = vmatpush.msra.mxu0 0.0
  %268 = vmatpush.msra.mxu0 0.0
  %269 = vmatpush.msra.mxu0 0.0
  %270 = vmatpush.msra.mxu0 0.0
  %271 = vmatpush.msra.mxu0 0.0
  %272 = vmatpush.msra.mxu0 %v257
  %273 = vmatpush.msra.mxu0 %v256
  %274 = vmatmul.f32.gmra.mxu0 %v168
  %v275 = vpop.f32.mrf.mxu0
  %v276 = vadd.f32 0.0, %v275
  %277 = vmatmul.f32.gmra.mxu0 %v171
  %v278 = vpop.f32.mrf.mxu0
  %v279 = vadd.f32 0.0, %v278
  %280 = vdwg.mxu0
  %281 = vst.msk [vmem:[%s3 + $0x27] sm:$0xff] %vm146, %v276
  %282 = vst.msk [vmem:[%s3 + $0x2f] sm:$0x1f] %vm197, %v279
  %s283 = scalar_lea.vmem [#allocation2], 64
  %v284 = vld [vmem:[%s283] sm:$0xff]
  %v285 = vld [vmem:[%s283 + $0x8] sm:$0xff]
  %286 = vmatpush.msra.mxu0 0.0
  %287 = vmatpush.msra.mxu0 0.0
  %288 = vmatpush.msra.mxu0 0.0
  %289 = vmatpush.msra.mxu0 0.0
  %290 = vmatpush.msra.mxu0 0.0
  %291 = vmatpush.msra.mxu0 0.0
  %292 = vmatpush.msra.mxu0 0.0
  %293 = vmatpush.msra.mxu0 0.0
  %294 = vmatpush.msra.mxu0 0.0
  %295 = vmatpush.msra.mxu0 0.0
  %296 = vmatpush.msra.mxu0 0.0
  %297 = vmatpush.msra.mxu0 0.0
  %298 = vmatpush.msra.mxu0 0.0
  %299 = vmatpush.msra.mxu0 0.0
  %300 = vmatpush.msra.mxu0 %v285
  %301 = vmatpush.msra.mxu0 %v284
  %302 = vmatmul.f32.gmra.mxu0 %v168
  %v303 = vpop.f32.mrf.mxu0
  %v304 = vadd.f32 0.0, %v303
  %305 = vmatmul.f32.gmra.mxu0 %v171
  %v306 = vpop.f32.mrf.mxu0
  %v307 = vadd.f32 0.0, %v306
  %308 = vdwg.mxu0
  %309 = vst.msk [vmem:[%s3 + $0x34] sm:$0xff] %vm146, %v304
  %310 = vst.msk [vmem:[%s3 + $0x3c] sm:$0x1f] %vm197, %v307
  %s311 = scalar_lea.vmem [#allocation2], 80
  %v312 = vld [vmem:[%s311] sm:$0xff]
  %v313 = vld [vmem:[%s311 + $0x8] sm:$0xff]
  %314 = vmatpush.msra.mxu0 0.0
  %315 = vmatpush.msra.mxu0 0.0
  %316 = vmatpush.msra.mxu0 0.0
  %317 = vmatpush.msra.mxu0 0.0
  %318 = vmatpush.msra.mxu0 0.0
  %319 = vmatpush.msra.mxu0 0.0
  %320 = vmatpush.msra.mxu0 0.0
  %321 = vmatpush.msra.mxu0 0.0
  %322 = vmatpush.msra.mxu0 0.0
  %323 = vmatpush.msra.mxu0 0.0
  %324 = vmatpush.msra.mxu0 0.0
  %325 = vmatpush.msra.mxu0 0.0
  %326 = vmatpush.msra.mxu0 0.0
  %327 = vmatpush.msra.mxu0 0.0
  %328 = vmatpush.msra.mxu0 %v313
  %329 = vmatpush.msra.mxu0 %v312
  %330 = vmatmul.f32.gmra.mxu0 %v168
  %v331 = vpop.f32.mrf.mxu0
  %v332 = vadd.f32 0.0, %v331
  %333 = vmatmul.f32.gmra.mxu0 %v171
  %v334 = vpop.f32.mrf.mxu0
  %v335 = vadd.f32 0.0, %v334
  %336 = vdwg.mxu0
  %337 = vst.msk [vmem:[%s3 + $0x41] sm:$0xff] %vm146, %v332
  %338 = vst.msk [vmem:[%s3 + $0x49] sm:$0x1f] %vm197, %v335
  %s339 = scalar_lea.vmem [#allocation2], 96
  %v340 = vld [vmem:[%s339] sm:$0xff]
  %v341 = vld [vmem:[%s339 + $0x8] sm:$0xff]
  %342 = vmatpush.msra.mxu0 0.0
  %343 = vmatpush.msra.mxu0 0.0
  %344 = vmatpush.msra.mxu0 0.0
  %345 = vmatpush.msra.mxu0 0.0
  %346 = vmatpush.msra.mxu0 0.0
  %347 = vmatpush.msra.mxu0 0.0
  %348 = vmatpush.msra.mxu0 0.0
  %349 = vmatpush.msra.mxu0 0.0
  %350 = vmatpush.msra.mxu0 0.0
  %351 = vmatpush.msra.mxu0 0.0
  %352 = vmatpush.msra.mxu0 0.0
  %353 = vmatpush.msra.mxu0 0.0
  %354 = vmatpush.msra.mxu0 0.0
  %355 = vmatpush.msra.mxu0 0.0
  %356 = vmatpush.msra.mxu0 %v341
  %357 = vmatpush.msra.mxu0 %v340
  %358 = vmatmul.f32.gmra.mxu0 %v168
  %v359 = vpop.f32.mrf.mxu0
  %v360 = vadd.f32 0.0, %v359
  %361 = vmatmul.f32.gmra.mxu0 %v171
  %v362 = vpop.f32.mrf.mxu0
  %v363 = vadd.f32 0.0, %v362
  %364 = vdwg.mxu0
  %365 = vst.msk [vmem:[%s3 + $0x4e] sm:$0xff] %vm146, %v360
  %366 = vst.msk [vmem:[%s3 + $0x56] sm:$0x1f] %vm197, %v363
  %s367 = scalar_lea.vmem [#allocation2], 112
  %v368 = vld [vmem:[%s367] sm:$0xff]
  %v369 = vld [vmem:[%s367 + $0x8] sm:$0xff]
  %370 = vmatpush.msra.mxu0 0.0
  %371 = vmatpush.msra.mxu0 0.0
  %372 = vmatpush.msra.mxu0 0.0
  %373 = vmatpush.msra.mxu0 0.0
  %374 = vmatpush.msra.mxu0 0.0
  %375 = vmatpush.msra.mxu0 0.0
  %376 = vmatpush.msra.mxu0 0.0
  %377 = vmatpush.msra.mxu0 0.0
  %378 = vmatpush.msra.mxu0 0.0
  %379 = vmatpush.msra.mxu0 0.0
  %380 = vmatpush.msra.mxu0 0.0
  %381 = vmatpush.msra.mxu0 0.0
  %382 = vmatpush.msra.mxu0 0.0
  %383 = vmatpush.msra.mxu0 0.0
  %384 = vmatpush.msra.mxu0 %v369
  %385 = vmatpush.msra.mxu0 %v368
  %386 = vmatmul.f32.gmra.mxu0 %v168
  %v387 = vpop.f32.mrf.mxu0
  %v388 = vadd.f32 0.0, %v387
  %389 = vmatmul.f32.gmra.mxu0 %v171
  %v390 = vpop.f32.mrf.mxu0
  %v391 = vadd.f32 0.0, %v390
  %392 = vdwg.mxu0
  %393 = vst.msk [vmem:[%s3 + $0x5b] sm:$0xff] %vm146, %v388
  %394 = vst.msk [vmem:[%s3 + $0x63] sm:$0x1f] %vm197, %v391
  // Predicated region
  $region14: #{tpu_custom_call.1} parent=0 // pred_check
    _
  $region15: #{tpu_custom_call.1} parent=0 // pred_check_branch
    %396 = sbr.rel (0) target = $region17
  $region16: #{tpu_custom_call.1} parent=0 // pred_region
    _
  $region17: #{tpu_custom_call.1} parent=0 // pred_fallthru
    _
  // Predicated region
  $region18: #{tpu_custom_call.1} parent=0 // pred_check
    _
  $region19: #{tpu_custom_call.1} parent=0 // pred_check_branch
    %398 = sbr.rel (0) target = $region21
  $region20: #{tpu_custom_call.1} parent=0 // pred_region
    _
  $region21: #{tpu_custom_call.1} parent=0 // pred_fallthru
    _

</llo_original>
